<compile_context>
chip_gen: v7x
topology: tpu7x:2x2x1
jax: 0.10.0
libtpu: 0.0.40
codegen_flags: <defaults>
</compile_context>

<pallas_src>
import jax
import jax.numpy as jnp
from jax.experimental import pallas as pl
from jax.experimental.pallas import tpu as pltpu

_LANE = 128
_SUBLANE = 8
_MAX_CHUNK = 32          # GRU steps per grid iteration (fully unrolled)


def _round_up(x, m):
    return ((x + m - 1) // m) * m


# --------------------------------------------------------------------------
# Kernel: Tc GRU steps per grid iteration, hidden carried across chunks in a
# VMEM scratch and within a chunk in vregs (fully unrolled static loop).
# --------------------------------------------------------------------------
def _gru_chunk_kernel(x_ref, h0_ref, wih_ref, whh_ref, bgi_ref, bhn_ref,
                      out_ref, h_scratch):
    """PyTorch GRU semantics, gate order [r | z | n]:
         r  = sigmoid(W_ir x + b_ir + W_hr h + b_hr)
         z  = sigmoid(W_iz x + b_iz + W_hz h + b_hz)
         n  = tanh  (W_in x + b_in + r * (W_hn h + b_hn))
         h' = (1 - z) * n + z * h
       b_ir+b_hr and b_iz+b_hz are pre-summed into bgi; b_hn stays separate
       (it lives inside the r*(...) term).
    """
    c = pl.program_id(0)
    Tc, Hp = out_ref.shape

    @pl.when(c == 0)
    def _():
        h_scratch[...] = h0_ref[...]

    # ---- Hoisted input projection for the whole chunk (off the serial path).
    # (Tc, in_pad) x (in_pad, 3*Hp) on the MXU; bf16 operands, f32 accumulate.
    gi = jnp.dot(x_ref[...].astype(jnp.bfloat16), wih_ref[...],
                 preferred_element_type=jnp.float32) + bgi_ref[...]   # (Tc, 3Hp)

    w_hh = whh_ref[...]          # (Hp, 3Hp) bf16, VMEM-resident across chunks
    b_hn = bhn_ref[...]          # (1, Hp) f32

    # ---- Serial recurrence: Tc is a small static constant, so this loop is
    # fully unrolled and the hidden state stays in vregs between steps.
    h = h_scratch[...]                                                # (1, Hp) f32
    for t in range(Tc):
        gh = jnp.dot(h.astype(jnp.bfloat16), w_hh,
                     preferred_element_type=jnp.float32)              # (1, 3Hp)
        gi_t = gi[t:t + 1, :]
        r = jax.nn.sigmoid(gi_t[:, 0 * Hp:1 * Hp] + gh[:, 0 * Hp:1 * Hp])
        z = jax.nn.sigmoid(gi_t[:, 1 * Hp:2 * Hp] + gh[:, 1 * Hp:2 * Hp])
        n = jnp.tanh(gi_t[:, 2 * Hp:3 * Hp] + r * (gh[:, 2 * Hp:3 * Hp] + b_hn))
        h = (1.0 - z) * n + z * h          # padded lanes stay exactly 0
        out_ref[t:t + 1, :] = h

    h_scratch[...] = h


# --------------------------------------------------------------------------
# Wrapper: pad, run the whole sequence in one pallas_call, slice padding off.
# --------------------------------------------------------------------------
def _gru_encode(x_seq, h0, w_ih_p, w_hh_p, b_gi_p, b_hn_p):
    """x_seq: (T, input_size) f32, h0: (1, H) f32 -> (outs (T, H), h_T (1, H))."""
    T, in_size = x_seq.shape
    H = h0.shape[-1]
    in_pad = w_ih_p.shape[0]
    h_pad = w_hh_p.shape[0]

    Tc = min(_round_up(T, _SUBLANE), _MAX_CHUNK)
    T_pad = _round_up(T, Tc)
    num_chunks = T_pad // Tc

    x_pad = jnp.zeros((T_pad, in_pad), jnp.float32).at[:T, :in_size].set(x_seq)
    h0_pad = jnp.zeros((1, h_pad), jnp.float32).at[:, :H].set(h0)

    grid_spec = pltpu.PrefetchScalarGridSpec(
        num_scalar_prefetch=0,
        grid=(num_chunks,),
        in_specs=[
            pl.BlockSpec((Tc, in_pad), lambda c: (c, 0)),          # x chunk streamed
            pl.BlockSpec((1, h_pad), lambda c: (0, 0)),            # h0 (resident)
            pl.BlockSpec((in_pad, 3 * h_pad), lambda c: (0, 0)),   # W_ih (resident)
            pl.BlockSpec((h_pad, 3 * h_pad), lambda c: (0, 0)),    # W_hh (resident)
            pl.BlockSpec((1, 3 * h_pad), lambda c: (0, 0)),        # b_gi (resident)
            pl.BlockSpec((1, h_pad), lambda c: (0, 0)),            # b_hn (resident)
        ],
        out_specs=pl.BlockSpec((Tc, h_pad), lambda c: (c, 0)),
        scratch_shapes=[pltpu.VMEM((1, h_pad), jnp.float32)],      # carried hidden
    )

    out_pad = pl.pallas_call(
        _gru_chunk_kernel,
        out_shape=jax.ShapeDtypeStruct((T_pad, h_pad), jnp.float32),
        grid_spec=grid_spec,
        compiler_params=pltpu.CompilerParams(
            dimension_semantics=("arbitrary",)),     # sequential recurrence
    )(x_pad, h0_pad, w_ih_p, w_hh_p, b_gi_p, b_hn_p)

    outs = out_pad[:T, :H]                           # (T, H)
    return outs, outs[T - 1:T]


_gru_encode_jit = jax.jit(_gru_encode)


# --------------------------------------------------------------------------
# Parameter packing (done ONCE): PyTorch (3H, in) -> transposed, zero-padded,
# gate-lane-aligned, bf16 weights; pre-summed f32 biases.
# --------------------------------------------------------------------------
def _pack_gate_weight(w, in_pad, h_pad):
    three_h, in_dim = w.shape
    H = three_h // 3
    wt = jnp.transpose(w).astype(jnp.float32)        # (in_dim, 3H)
    out = jnp.zeros((in_pad, 3 * h_pad), jnp.float32)
    for g in range(3):                               # [r | z | n]
        out = out.at[:in_dim, g * h_pad:g * h_pad + H].set(wt[:, g * H:(g + 1) * H])
    return out.astype(jnp.bfloat16)


def _pack_bias_gi(b_ih, b_hh, h_pad):
    """Input-path bias columns: [b_ir+b_hr | b_iz+b_hz | b_in]."""
    H = b_ih.shape[0] // 3
    out = jnp.zeros((1, 3 * h_pad), jnp.float32)
    out = out.at[0, 0 * h_pad:0 * h_pad + H].set(b_ih[0:H] + b_hh[0:H])
    out = out.at[0, 1 * h_pad:1 * h_pad + H].set(b_ih[H:2 * H] + b_hh[H:2 * H])
    out = out.at[0, 2 * h_pad:2 * h_pad + H].set(b_ih[2 * H:3 * H])
    return out


def _pack_bias_hn(b_hh, h_pad):
    H = b_hh.shape[0] // 3
    return jnp.zeros((1, h_pad), jnp.float32).at[0, :H].set(b_hh[2 * H:3 * H])


class EncoderRNN:
    """JAX/Pallas port of the PyTorch EncoderRNN (single-layer GRU, batch=1)."""

    def __init__(self, input_size, hidden_size, key):
        self.input_size = input_size
        self.hidden_size = hidden_size

        # PyTorch GRU default init U(-1/sqrt(H), 1/sqrt(H)); PyTorch layouts
        # are kept in f32 for the reference check.
        k = 1.0 / jnp.sqrt(jnp.float32(hidden_size))
        k1, k2, k3, k4 = jax.random.split(key, 4)
        self.w_ih = jax.random.uniform(k1, (3 * hidden_size, input_size),
                                       jnp.float32, -k, k)
        self.w_hh = jax.random.uniform(k2, (3 * hidden_size, hidden_size),
                                       jnp.float32, -k, k)
        self.b_ih = jax.random.uniform(k3, (3 * hidden_size,), jnp.float32, -k, k)
        self.b_hh = jax.random.uniform(k4, (3 * hidden_size,), jnp.float32, -k, k)

        # Kernel layouts, built once (no per-call transpose / reshape).
        self._in_pad = _round_up(input_size, _LANE)
        self._h_pad = _round_up(hidden_size, _LANE)
        self.w_ih_p = _pack_gate_weight(self.w_ih, self._in_pad, self._h_pad)
        self.w_hh_p = _pack_gate_weight(self.w_hh, self._h_pad, self._h_pad)
        self.b_gi_p = _pack_bias_gi(self.b_ih, self.b_hh, self._h_pad)
        self.b_hn_p = _pack_bias_hn(self.b_hh, self._h_pad)

    def forward(self, inp, hidden):
        # PyTorch: input.view(1, 1, -1); GRU over seq_len=1, batch=1.
        x_seq = inp.reshape(1, self.input_size)               # (T=1, input_size)
        h0 = hidden.reshape(1, self.hidden_size)              # (1, H)
        outs, h_T = _gru_encode_jit(x_seq, h0, self.w_ih_p, self.w_hh_p,
                                    self.b_gi_p, self.b_hn_p)
        output = outs.reshape(1, 1, self.hidden_size)         # (seq=1, batch=1, H)
        hidden_out = h_T.reshape(1, 1, self.hidden_size)
        return output, hidden_out

    def forward_sequence(self, x_seq, hidden):
        """Encode a full (T, input_size) sequence in ONE kernel launch."""
        h0 = hidden.reshape(1, self.hidden_size)
        outs, h_T = _gru_encode_jit(x_seq, h0, self.w_ih_p, self.w_hh_p,
                                    self.b_gi_p, self.b_hn_p)
        T = x_seq.shape[0]
        return (outs.reshape(T, 1, self.hidden_size),
                h_T.reshape(1, 1, self.hidden_size))

    def initHidden(self):
        return jnp.zeros((1, 1, self.hidden_size), dtype=jnp.float32)


# --------------------------------------------------------------------------
# Pure-JAX f32 reference (PyTorch GRU semantics) for correctness checking.
# --------------------------------------------------------------------------
def _gru_reference_step(x_row, h_row, w_ih, w_hh, b_ih, b_hh):
    H = h_row.shape[-1]
    gi = x_row @ w_ih.T + b_ih
    gh = h_row @ w_hh.T + b_hh
    r = jax.nn.sigmoid(gi[:, :H] + gh[:, :H])
    z = jax.nn.sigmoid(gi[:, H:2 * H] + gh[:, H:2 * H])
    n = jnp.tanh(gi[:, 2 * H:] + r * gh[:, 2 * H:])
    return (1.0 - z) * n + z * h_row


if __name__ == "__main__":
    input_size = 16
    hidden_size = 32
    seq_len = 8

    key = jax.random.PRNGKey(0)
    k_params, k_x, k_h, k_seq = jax.random.split(key, 4)

    enc = EncoderRNN(input_size, hidden_size, k_params)

    # Kernel matmuls run in bf16 on the MXU (f32 accumulation) -> compare to
    # the f32 reference with a bf16-appropriate tolerance.
    ATOL = 2e-2
    RTOL = 2e-2

    # --- single-step forward (exact PyTorch forward() semantics) -----------
    x = jax.random.normal(k_x, (input_size,), dtype=jnp.float32)
    h0 = enc.initHidden() + 0.1 * jax.random.normal(k_h, (1, 1, hidden_size),
                                                    dtype=jnp.float32)
    output, hidden = enc.forward(x, h0)
    output = jax.block_until_ready(output)
    hidden = jax.block_until_ready(hidden)
    assert output.shape == (1, 1, hidden_size)
    assert hidden.shape == (1, 1, hidden_size)

    ref1 = _gru_reference_step(x.reshape(1, -1), h0.reshape(1, hidden_size),
                               enc.w_ih, enc.w_hh, enc.b_ih, enc.b_hh)
    assert jnp.allclose(output.reshape(1, hidden_size), ref1, atol=ATOL, rtol=RTOL)
    assert jnp.allclose(hidden.reshape(1, hidden_size), ref1, atol=ATOL, rtol=RTOL)

    # --- full-sequence path: whole recurrence inside one pallas_call -------
    x_seq = jax.random.normal(k_seq, (seq_len, input_size), dtype=jnp.float32)
    outs, h_T = enc.forward_sequence(x_seq, enc.initHidden())
    outs = jax.block_until_ready(outs)
    h_T = jax.block_until_ready(h_T)
    assert outs.shape == (seq_len, 1, hidden_size)
    assert h_T.shape == (1, 1, hidden_size)

    h_ref = jnp.zeros((1, hidden_size), dtype=jnp.float32)
    ref_outs = []
    for t in range(seq_len):
        h_ref = _gru_reference_step(x_seq[t:t + 1], h_ref,
                                    enc.w_ih, enc.w_hh, enc.b_ih, enc.b_hh)
        ref_outs.append(h_ref)
    ref_outs = jnp.stack(ref_outs, axis=0)  # (T, 1, H)

    assert jnp.allclose(outs, ref_outs, atol=ATOL, rtol=RTOL)
    assert jnp.allclose(h_T.reshape(1, hidden_size), h_ref, atol=ATOL, rtol=RTOL)

    print("KERNEL_OK")
</pallas_src>

<mosaic_0001>
module attributes {stable_mosaic.version = 11 : i64} {
  func.func @_gru_chunk_kernel(%arg0: i32, %arg1: memref<8x128xf32, #tpu.memory_space<vmem>>, %arg2: memref<1x128xf32, #tpu.memory_space<vmem>>, %arg3: memref<128x384xbf16, #tpu.memory_space<vmem>>, %arg4: memref<128x384xbf16, #tpu.memory_space<vmem>>, %arg5: memref<1x384xf32, #tpu.memory_space<vmem>>, %arg6: memref<1x128xf32, #tpu.memory_space<vmem>>, %arg7: memref<8x128xf32, #tpu.memory_space<vmem>>, %arg8: memref<1x128xf32, #tpu.memory_space<vmem>>) attributes {dimension_semantics = [#tpu.dimension_semantics<arbitrary>], iteration_bounds = array<i64: 1>, scalar_prefetch = 0 : i64, scratch_operands = 1 : i64, tpu.core_type = #tpu.core_type<tc>, window_params = [{transform_indices = @transform_0, window_bounds = array<i64: 8, 128>}, {pipeline_mode = #tpu.pipeline_mode<synchronous>, transform_indices = @transform_1, window_bounds = array<i64: 1, 128>}, {pipeline_mode = #tpu.pipeline_mode<synchronous>, transform_indices = @transform_2, window_bounds = array<i64: 128, 384>}, {pipeline_mode = #tpu.pipeline_mode<synchronous>, transform_indices = @transform_3, window_bounds = array<i64: 128, 384>}, {pipeline_mode = #tpu.pipeline_mode<synchronous>, transform_indices = @transform_4, window_bounds = array<i64: 1, 384>}, {pipeline_mode = #tpu.pipeline_mode<synchronous>, transform_indices = @transform_5, window_bounds = array<i64: 1, 128>}, {transform_indices = @transform_6, window_bounds = array<i64: 8, 128>}]} {
    %c0_i32 = arith.constant 0 : i32
    %0 = arith.cmpi eq, %arg0, %c0_i32 : i32
    %1 = arith.extui %0 : i1 to i32
    %c0_i32_0 = arith.constant 0 : i32
    %2 = arith.cmpi ne, %1, %c0_i32_0 : i32
    scf.if %2 {
      %c0_55 = arith.constant 0 : index
      %c0_56 = arith.constant 0 : index
      %262 = vector.load %arg2[%c0_55, %c0_56] : memref<1x128xf32, #tpu.memory_space<vmem>>, vector<1x128xf32>
      %c0_57 = arith.constant 0 : index
      %c0_58 = arith.constant 0 : index
      %263 = vector.load %arg8[%c0_57, %c0_58] : memref<1x128xf32, #tpu.memory_space<vmem>>, vector<1x128xf32>
      tpu.vector_store %arg8[%c0_57, %c0_58], %262 {strides = array<i32>} : memref<1x128xf32, #tpu.memory_space<vmem>>, vector<1x128xf32>,
    } else {
    }
    %c0 = arith.constant 0 : index
    %c0_1 = arith.constant 0 : index
    %3 = vector.load %arg1[%c0, %c0_1] : memref<8x128xf32, #tpu.memory_space<vmem>>, vector<8x128xf32>
    %4 = arith.truncf %3 : vector<8x128xf32> to vector<8x128xbf16>
    %c0_2 = arith.constant 0 : index
    %c0_3 = arith.constant 0 : index
    %5 = vector.load %arg3[%c0_2, %c0_3] : memref<128x384xbf16, #tpu.memory_space<vmem>>, vector<128x384xbf16>
    %cst = arith.constant dense<0.000000e+00> : vector<8x384xf32>
    %6 = tpu.matmul %4, %5, %cst {dimension_numbers = #tpu.dot_dimension_numbers<[1], [0], [0], [1], [0, 0, 1, 1], [], []>} : vector<8x128xbf16>, vector<128x384xbf16>, vector<8x384xf32> -> vector<8x384xf32>
    %c0_4 = arith.constant 0 : index
    %c0_5 = arith.constant 0 : index
    %7 = vector.load %arg5[%c0_4, %c0_5] : memref<1x384xf32, #tpu.memory_space<vmem>>, vector<1x384xf32>
    %8 = vector.broadcast %7 : vector<1x384xf32> to vector<8x384xf32>
    %9 = arith.addf %6, %8 : vector<8x384xf32>
    %c0_6 = arith.constant 0 : index
    %c0_7 = arith.constant 0 : index
    %10 = vector.load %arg4[%c0_6, %c0_7] : memref<128x384xbf16, #tpu.memory_space<vmem>>, vector<128x384xbf16>
    %c0_8 = arith.constant 0 : index
    %c0_9 = arith.constant 0 : index
    %11 = vector.load %arg6[%c0_8, %c0_9] : memref<1x128xf32, #tpu.memory_space<vmem>>, vector<1x128xf32>
    %c0_10 = arith.constant 0 : index
    %c0_11 = arith.constant 0 : index
    %12 = vector.load %arg8[%c0_10, %c0_11] : memref<1x128xf32, #tpu.memory_space<vmem>>, vector<1x128xf32>
    %13 = arith.truncf %12 : vector<1x128xf32> to vector<1x128xbf16>
    %cst_12 = arith.constant dense<0.000000e+00> : vector<1x384xf32>
    %14 = tpu.matmul %13, %10, %cst_12 {dimension_numbers = #tpu.dot_dimension_numbers<[1], [0], [0], [1], [0, 0, 1, 1], [], []>} : vector<1x128xbf16>, vector<128x384xbf16>, vector<1x384xf32> -> vector<1x384xf32>
    %15 = vector.extract_strided_slice %9 {offsets = [0, 0], sizes = [1, 384], strides = [1, 1]} : vector<8x384xf32> to vector<1x384xf32>
    %16 = vector.extract_strided_slice %15 {offsets = [0, 0], sizes = [1, 128], strides = [1, 1]} : vector<1x384xf32> to vector<1x128xf32>
    %17 = vector.extract_strided_slice %14 {offsets = [0, 0], sizes = [1, 128], strides = [1, 1]} : vector<1x384xf32> to vector<1x128xf32>
    %18 = arith.addf %16, %17 : vector<1x128xf32>
    %19 = arith.negf %18 : vector<1x128xf32>
    %20 = math.exp %19 : vector<1x128xf32>
    %cst_13 = arith.constant 1.000000e+00 : f32
    %21 = vector.broadcast %cst_13 : f32 to vector<1x128xf32>
    %22 = arith.addf %21, %20 : vector<1x128xf32>
    %23 = arith.divf %21, %22 : vector<1x128xf32>
    %24 = vector.extract_strided_slice %15 {offsets = [0, 128], sizes = [1, 128], strides = [1, 1]} : vector<1x384xf32> to vector<1x128xf32>
    %25 = vector.extract_strided_slice %14 {offsets = [0, 128], sizes = [1, 128], strides = [1, 1]} : vector<1x384xf32> to vector<1x128xf32>
    %26 = arith.addf %24, %25 : vector<1x128xf32>
    %27 = arith.negf %26 : vector<1x128xf32>
    %28 = math.exp %27 : vector<1x128xf32>
    %cst_14 = arith.constant 1.000000e+00 : f32
    %29 = vector.broadcast %cst_14 : f32 to vector<1x128xf32>
    %30 = arith.addf %29, %28 : vector<1x128xf32>
    %31 = arith.divf %29, %30 : vector<1x128xf32>
    %32 = vector.extract_strided_slice %15 {offsets = [0, 256], sizes = [1, 128], strides = [1, 1]} : vector<1x384xf32> to vector<1x128xf32>
    %33 = vector.extract_strided_slice %14 {offsets = [0, 256], sizes = [1, 128], strides = [1, 1]} : vector<1x384xf32> to vector<1x128xf32>
    %34 = arith.addf %33, %11 : vector<1x128xf32>
    %35 = arith.mulf %23, %34 : vector<1x128xf32>
    %36 = arith.addf %32, %35 : vector<1x128xf32>
    %37 = math.tanh %36 : vector<1x128xf32>
    %cst_15 = arith.constant 1.000000e+00 : f32
    %38 = vector.broadcast %cst_15 : f32 to vector<1x128xf32>
    %39 = arith.subf %38, %31 : vector<1x128xf32>
    %40 = arith.mulf %39, %37 : vector<1x128xf32>
    %41 = arith.mulf %31, %12 : vector<1x128xf32>
    %42 = arith.addf %40, %41 : vector<1x128xf32>
    %c0_16 = arith.constant 0 : index
    %c0_17 = arith.constant 0 : index
    %43 = vector.load %arg7[%c0_16, %c0_17] : memref<8x128xf32, #tpu.memory_space<vmem>>, vector<1x128xf32>
    tpu.vector_store %arg7[%c0_16, %c0_17], %42 {strides = array<i32>} : memref<8x128xf32, #tpu.memory_space<vmem>>, vector<1x128xf32>,
    %44 = arith.truncf %42 : vector<1x128xf32> to vector<1x128xbf16>
    %cst_18 = arith.constant dense<0.000000e+00> : vector<1x384xf32>
    %45 = tpu.matmul %44, %10, %cst_18 {dimension_numbers = #tpu.dot_dimension_numbers<[1], [0], [0], [1], [0, 0, 1, 1], [], []>} : vector<1x128xbf16>, vector<128x384xbf16>, vector<1x384xf32> -> vector<1x384xf32>
    %46 = vector.extract_strided_slice %9 {offsets = [1, 0], sizes = [1, 384], strides = [1, 1]} : vector<8x384xf32> to vector<1x384xf32>
    %47 = vector.extract_strided_slice %46 {offsets = [0, 0], sizes = [1, 128], strides = [1, 1]} : vector<1x384xf32> to vector<1x128xf32>
    %48 = vector.extract_strided_slice %45 {offsets = [0, 0], sizes = [1, 128], strides = [1, 1]} : vector<1x384xf32> to vector<1x128xf32>
    %49 = arith.addf %47, %48 : vector<1x128xf32>
    %50 = arith.negf %49 : vector<1x128xf32>
    %51 = math.exp %50 : vector<1x128xf32>
    %cst_19 = arith.constant 1.000000e+00 : f32
    %52 = vector.broadcast %cst_19 : f32 to vector<1x128xf32>
    %53 = arith.addf %52, %51 : vector<1x128xf32>
    %54 = arith.divf %52, %53 : vector<1x128xf32>
    %55 = vector.extract_strided_slice %46 {offsets = [0, 128], sizes = [1, 128], strides = [1, 1]} : vector<1x384xf32> to vector<1x128xf32>
    %56 = vector.extract_strided_slice %45 {offsets = [0, 128], sizes = [1, 128], strides = [1, 1]} : vector<1x384xf32> to vector<1x128xf32>
    %57 = arith.addf %55, %56 : vector<1x128xf32>
    %58 = arith.negf %57 : vector<1x128xf32>
    %59 = math.exp %58 : vector<1x128xf32>
    %cst_20 = arith.constant 1.000000e+00 : f32
    %60 = vector.broadcast %cst_20 : f32 to vector<1x128xf32>
    %61 = arith.addf %60, %59 : vector<1x128xf32>
    %62 = arith.divf %60, %61 : vector<1x128xf32>
    %63 = vector.extract_strided_slice %46 {offsets = [0, 256], sizes = [1, 128], strides = [1, 1]} : vector<1x384xf32> to vector<1x128xf32>
    %64 = vector.extract_strided_slice %45 {offsets = [0, 256], sizes = [1, 128], strides = [1, 1]} : vector<1x384xf32> to vector<1x128xf32>
    %65 = arith.addf %64, %11 : vector<1x128xf32>
    %66 = arith.mulf %54, %65 : vector<1x128xf32>
    %67 = arith.addf %63, %66 : vector<1x128xf32>
    %68 = math.tanh %67 : vector<1x128xf32>
    %cst_21 = arith.constant 1.000000e+00 : f32
    %69 = vector.broadcast %cst_21 : f32 to vector<1x128xf32>
    %70 = arith.subf %69, %62 : vector<1x128xf32>
    %71 = arith.mulf %70, %68 : vector<1x128xf32>
    %72 = arith.mulf %62, %42 : vector<1x128xf32>
    %73 = arith.addf %71, %72 : vector<1x128xf32>
    %c1 = arith.constant 1 : index
    %c0_22 = arith.constant 0 : index
    %74 = vector.load %arg7[%c1, %c0_22] : memref<8x128xf32, #tpu.memory_space<vmem>>, vector<1x128xf32>
    tpu.vector_store %arg7[%c1, %c0_22], %73 {strides = array<i32>} : memref<8x128xf32, #tpu.memory_space<vmem>>, vector<1x128xf32>,
    %75 = arith.truncf %73 : vector<1x128xf32> to vector<1x128xbf16>
    %cst_23 = arith.constant dense<0.000000e+00> : vector<1x384xf32>
    %76 = tpu.matmul %75, %10, %cst_23 {dimension_numbers = #tpu.dot_dimension_numbers<[1], [0], [0], [1], [0, 0, 1, 1], [], []>} : vector<1x128xbf16>, vector<128x384xbf16>, vector<1x384xf32> -> vector<1x384xf32>
    %77 = vector.extract_strided_slice %9 {offsets = [2, 0], sizes = [1, 384], strides = [1, 1]} : vector<8x384xf32> to vector<1x384xf32>
    %78 = vector.extract_strided_slice %77 {offsets = [0, 0], sizes = [1, 128], strides = [1, 1]} : vector<1x384xf32> to vector<1x128xf32>
    %79 = vector.extract_strided_slice %76 {offsets = [0, 0], sizes = [1, 128], strides = [1, 1]} : vector<1x384xf32> to vector<1x128xf32>
    %80 = arith.addf %78, %79 : vector<1x128xf32>
    %81 = arith.negf %80 : vector<1x128xf32>
    %82 = math.exp %81 : vector<1x128xf32>
    %cst_24 = arith.constant 1.000000e+00 : f32
    %83 = vector.broadcast %cst_24 : f32 to vector<1x128xf32>
    %84 = arith.addf %83, %82 : vector<1x128xf32>
    %85 = arith.divf %83, %84 : vector<1x128xf32>
    %86 = vector.extract_strided_slice %77 {offsets = [0, 128], sizes = [1, 128], strides = [1, 1]} : vector<1x384xf32> to vector<1x128xf32>
    %87 = vector.extract_strided_slice %76 {offsets = [0, 128], sizes = [1, 128], strides = [1, 1]} : vector<1x384xf32> to vector<1x128xf32>
    %88 = arith.addf %86, %87 : vector<1x128xf32>
    %89 = arith.negf %88 : vector<1x128xf32>
    %90 = math.exp %89 : vector<1x128xf32>
    %cst_25 = arith.constant 1.000000e+00 : f32
    %91 = vector.broadcast %cst_25 : f32 to vector<1x128xf32>
    %92 = arith.addf %91, %90 : vector<1x128xf32>
    %93 = arith.divf %91, %92 : vector<1x128xf32>
    %94 = vector.extract_strided_slice %77 {offsets = [0, 256], sizes = [1, 128], strides = [1, 1]} : vector<1x384xf32> to vector<1x128xf32>
    %95 = vector.extract_strided_slice %76 {offsets = [0, 256], sizes = [1, 128], strides = [1, 1]} : vector<1x384xf32> to vector<1x128xf32>
    %96 = arith.addf %95, %11 : vector<1x128xf32>
    %97 = arith.mulf %85, %96 : vector<1x128xf32>
    %98 = arith.addf %94, %97 : vector<1x128xf32>
    %99 = math.tanh %98 : vector<1x128xf32>
    %cst_26 = arith.constant 1.000000e+00 : f32
    %100 = vector.broadcast %cst_26 : f32 to vector<1x128xf32>
    %101 = arith.subf %100, %93 : vector<1x128xf32>
    %102 = arith.mulf %101, %99 : vector<1x128xf32>
    %103 = arith.mulf %93, %73 : vector<1x128xf32>
    %104 = arith.addf %102, %103 : vector<1x128xf32>
    %c2 = arith.constant 2 : index
    %c0_27 = arith.constant 0 : index
    %105 = vector.load %arg7[%c2, %c0_27] : memref<8x128xf32, #tpu.memory_space<vmem>>, vector<1x128xf32>
    tpu.vector_store %arg7[%c2, %c0_27], %104 {strides = array<i32>} : memref<8x128xf32, #tpu.memory_space<vmem>>, vector<1x128xf32>,
    %106 = arith.truncf %104 : vector<1x128xf32> to vector<1x128xbf16>
    %cst_28 = arith.constant dense<0.000000e+00> : vector<1x384xf32>
    %107 = tpu.matmul %106, %10, %cst_28 {dimension_numbers = #tpu.dot_dimension_numbers<[1], [0], [0], [1], [0, 0, 1, 1], [], []>} : vector<1x128xbf16>, vector<128x384xbf16>, vector<1x384xf32> -> vector<1x384xf32>
    %108 = vector.extract_strided_slice %9 {offsets = [3, 0], sizes = [1, 384], strides = [1, 1]} : vector<8x384xf32> to vector<1x384xf32>
    %109 = vector.extract_strided_slice %108 {offsets = [0, 0], sizes = [1, 128], strides = [1, 1]} : vector<1x384xf32> to vector<1x128xf32>
    %110 = vector.extract_strided_slice %107 {offsets = [0, 0], sizes = [1, 128], strides = [1, 1]} : vector<1x384xf32> to vector<1x128xf32>
    %111 = arith.addf %109, %110 : vector<1x128xf32>
    %112 = arith.negf %111 : vector<1x128xf32>
    %113 = math.exp %112 : vector<1x128xf32>
    %cst_29 = arith.constant 1.000000e+00 : f32
    %114 = vector.broadcast %cst_29 : f32 to vector<1x128xf32>
    %115 = arith.addf %114, %113 : vector<1x128xf32>
    %116 = arith.divf %114, %115 : vector<1x128xf32>
    %117 = vector.extract_strided_slice %108 {offsets = [0, 128], sizes = [1, 128], strides = [1, 1]} : vector<1x384xf32> to vector<1x128xf32>
    %118 = vector.extract_strided_slice %107 {offsets = [0, 128], sizes = [1, 128], strides = [1, 1]} : vector<1x384xf32> to vector<1x128xf32>
    %119 = arith.addf %117, %118 : vector<1x128xf32>
    %120 = arith.negf %119 : vector<1x128xf32>
    %121 = math.exp %120 : vector<1x128xf32>
    %cst_30 = arith.constant 1.000000e+00 : f32
    %122 = vector.broadcast %cst_30 : f32 to vector<1x128xf32>
    %123 = arith.addf %122, %121 : vector<1x128xf32>
    %124 = arith.divf %122, %123 : vector<1x128xf32>
    %125 = vector.extract_strided_slice %108 {offsets = [0, 256], sizes = [1, 128], strides = [1, 1]} : vector<1x384xf32> to vector<1x128xf32>
    %126 = vector.extract_strided_slice %107 {offsets = [0, 256], sizes = [1, 128], strides = [1, 1]} : vector<1x384xf32> to vector<1x128xf32>
    %127 = arith.addf %126, %11 : vector<1x128xf32>
    %128 = arith.mulf %116, %127 : vector<1x128xf32>
    %129 = arith.addf %125, %128 : vector<1x128xf32>
    %130 = math.tanh %129 : vector<1x128xf32>
    %cst_31 = arith.constant 1.000000e+00 : f32
    %131 = vector.broadcast %cst_31 : f32 to vector<1x128xf32>
    %132 = arith.subf %131, %124 : vector<1x128xf32>
    %133 = arith.mulf %132, %130 : vector<1x128xf32>
    %134 = arith.mulf %124, %104 : vector<1x128xf32>
    %135 = arith.addf %133, %134 : vector<1x128xf32>
    %c3 = arith.constant 3 : index
    %c0_32 = arith.constant 0 : index
    %136 = vector.load %arg7[%c3, %c0_32] : memref<8x128xf32, #tpu.memory_space<vmem>>, vector<1x128xf32>
    tpu.vector_store %arg7[%c3, %c0_32], %135 {strides = array<i32>} : memref<8x128xf32, #tpu.memory_space<vmem>>, vector<1x128xf32>,
    %137 = arith.truncf %135 : vector<1x128xf32> to vector<1x128xbf16>
    %cst_33 = arith.constant dense<0.000000e+00> : vector<1x384xf32>
    %138 = tpu.matmul %137, %10, %cst_33 {dimension_numbers = #tpu.dot_dimension_numbers<[1], [0], [0], [1], [0, 0, 1, 1], [], []>} : vector<1x128xbf16>, vector<128x384xbf16>, vector<1x384xf32> -> vector<1x384xf32>
    %139 = vector.extract_strided_slice %9 {offsets = [4, 0], sizes = [1, 384], strides = [1, 1]} : vector<8x384xf32> to vector<1x384xf32>
    %140 = vector.extract_strided_slice %139 {offsets = [0, 0], sizes = [1, 128], strides = [1, 1]} : vector<1x384xf32> to vector<1x128xf32>
    %141 = vector.extract_strided_slice %138 {offsets = [0, 0], sizes = [1, 128], strides = [1, 1]} : vector<1x384xf32> to vector<1x128xf32>
    %142 = arith.addf %140, %141 : vector<1x128xf32>
    %143 = arith.negf %142 : vector<1x128xf32>
    %144 = math.exp %143 : vector<1x128xf32>
    %cst_34 = arith.constant 1.000000e+00 : f32
    %145 = vector.broadcast %cst_34 : f32 to vector<1x128xf32>
    %146 = arith.addf %145, %144 : vector<1x128xf32>
    %147 = arith.divf %145, %146 : vector<1x128xf32>
    %148 = vector.extract_strided_slice %139 {offsets = [0, 128], sizes = [1, 128], strides = [1, 1]} : vector<1x384xf32> to vector<1x128xf32>
    %149 = vector.extract_strided_slice %138 {offsets = [0, 128], sizes = [1, 128], strides = [1, 1]} : vector<1x384xf32> to vector<1x128xf32>
    %150 = arith.addf %148, %149 : vector<1x128xf32>
    %151 = arith.negf %150 : vector<1x128xf32>
    %152 = math.exp %151 : vector<1x128xf32>
    %cst_35 = arith.constant 1.000000e+00 : f32
    %153 = vector.broadcast %cst_35 : f32 to vector<1x128xf32>
    %154 = arith.addf %153, %152 : vector<1x128xf32>
    %155 = arith.divf %153, %154 : vector<1x128xf32>
    %156 = vector.extract_strided_slice %139 {offsets = [0, 256], sizes = [1, 128], strides = [1, 1]} : vector<1x384xf32> to vector<1x128xf32>
    %157 = vector.extract_strided_slice %138 {offsets = [0, 256], sizes = [1, 128], strides = [1, 1]} : vector<1x384xf32> to vector<1x128xf32>
    %158 = arith.addf %157, %11 : vector<1x128xf32>
    %159 = arith.mulf %147, %158 : vector<1x128xf32>
    %160 = arith.addf %156, %159 : vector<1x128xf32>
    %161 = math.tanh %160 : vector<1x128xf32>
    %cst_36 = arith.constant 1.000000e+00 : f32
    %162 = vector.broadcast %cst_36 : f32 to vector<1x128xf32>
    %163 = arith.subf %162, %155 : vector<1x128xf32>
    %164 = arith.mulf %163, %161 : vector<1x128xf32>
    %165 = arith.mulf %155, %135 : vector<1x128xf32>
    %166 = arith.addf %164, %165 : vector<1x128xf32>
    %c4 = arith.constant 4 : index
    %c0_37 = arith.constant 0 : index
    %167 = vector.load %arg7[%c4, %c0_37] : memref<8x128xf32, #tpu.memory_space<vmem>>, vector<1x128xf32>
    tpu.vector_store %arg7[%c4, %c0_37], %166 {strides = array<i32>} : memref<8x128xf32, #tpu.memory_space<vmem>>, vector<1x128xf32>,
    %168 = arith.truncf %166 : vector<1x128xf32> to vector<1x128xbf16>
    %cst_38 = arith.constant dense<0.000000e+00> : vector<1x384xf32>
    %169 = tpu.matmul %168, %10, %cst_38 {dimension_numbers = #tpu.dot_dimension_numbers<[1], [0], [0], [1], [0, 0, 1, 1], [], []>} : vector<1x128xbf16>, vector<128x384xbf16>, vector<1x384xf32> -> vector<1x384xf32>
    %170 = vector.extract_strided_slice %9 {offsets = [5, 0], sizes = [1, 384], strides = [1, 1]} : vector<8x384xf32> to vector<1x384xf32>
    %171 = vector.extract_strided_slice %170 {offsets = [0, 0], sizes = [1, 128], strides = [1, 1]} : vector<1x384xf32> to vector<1x128xf32>
    %172 = vector.extract_strided_slice %169 {offsets = [0, 0], sizes = [1, 128], strides = [1, 1]} : vector<1x384xf32> to vector<1x128xf32>
    %173 = arith.addf %171, %172 : vector<1x128xf32>
    %174 = arith.negf %173 : vector<1x128xf32>
    %175 = math.exp %174 : vector<1x128xf32>
    %cst_39 = arith.constant 1.000000e+00 : f32
    %176 = vector.broadcast %cst_39 : f32 to vector<1x128xf32>
    %177 = arith.addf %176, %175 : vector<1x128xf32>
    %178 = arith.divf %176, %177 : vector<1x128xf32>
    %179 = vector.extract_strided_slice %170 {offsets = [0, 128], sizes = [1, 128], strides = [1, 1]} : vector<1x384xf32> to vector<1x128xf32>
    %180 = vector.extract_strided_slice %169 {offsets = [0, 128], sizes = [1, 128], strides = [1, 1]} : vector<1x384xf32> to vector<1x128xf32>
    %181 = arith.addf %179, %180 : vector<1x128xf32>
    %182 = arith.negf %181 : vector<1x128xf32>
    %183 = math.exp %182 : vector<1x128xf32>
    %cst_40 = arith.constant 1.000000e+00 : f32
    %184 = vector.broadcast %cst_40 : f32 to vector<1x128xf32>
    %185 = arith.addf %184, %183 : vector<1x128xf32>
    %186 = arith.divf %184, %185 : vector<1x128xf32>
    %187 = vector.extract_strided_slice %170 {offsets = [0, 256], sizes = [1, 128], strides = [1, 1]} : vector<1x384xf32> to vector<1x128xf32>
    %188 = vector.extract_strided_slice %169 {offsets = [0, 256], sizes = [1, 128], strides = [1, 1]} : vector<1x384xf32> to vector<1x128xf32>
    %189 = arith.addf %188, %11 : vector<1x128xf32>
    %190 = arith.mulf %178, %189 : vector<1x128xf32>
    %191 = arith.addf %187, %190 : vector<1x128xf32>
    %192 = math.tanh %191 : vector<1x128xf32>
    %cst_41 = arith.constant 1.000000e+00 : f32
    %193 = vector.broadcast %cst_41 : f32 to vector<1x128xf32>
    %194 = arith.subf %193, %186 : vector<1x128xf32>
    %195 = arith.mulf %194, %192 : vector<1x128xf32>
    %196 = arith.mulf %186, %166 : vector<1x128xf32>
    %197 = arith.addf %195, %196 : vector<1x128xf32>
    %c5 = arith.constant 5 : index
    %c0_42 = arith.constant 0 : index
    %198 = vector.load %arg7[%c5, %c0_42] : memref<8x128xf32, #tpu.memory_space<vmem>>, vector<1x128xf32>
    tpu.vector_store %arg7[%c5, %c0_42], %197 {strides = array<i32>} : memref<8x128xf32, #tpu.memory_space<vmem>>, vector<1x128xf32>,
    %199 = arith.truncf %197 : vector<1x128xf32> to vector<1x128xbf16>
    %cst_43 = arith.constant dense<0.000000e+00> : vector<1x384xf32>
    %200 = tpu.matmul %199, %10, %cst_43 {dimension_numbers = #tpu.dot_dimension_numbers<[1], [0], [0], [1], [0, 0, 1, 1], [], []>} : vector<1x128xbf16>, vector<128x384xbf16>, vector<1x384xf32> -> vector<1x384xf32>
    %201 = vector.extract_strided_slice %9 {offsets = [6, 0], sizes = [1, 384], strides = [1, 1]} : vector<8x384xf32> to vector<1x384xf32>
    %202 = vector.extract_strided_slice %201 {offsets = [0, 0], sizes = [1, 128], strides = [1, 1]} : vector<1x384xf32> to vector<1x128xf32>
    %203 = vector.extract_strided_slice %200 {offsets = [0, 0], sizes = [1, 128], strides = [1, 1]} : vector<1x384xf32> to vector<1x128xf32>
    %204 = arith.addf %202, %203 : vector<1x128xf32>
    %205 = arith.negf %204 : vector<1x128xf32>
    %206 = math.exp %205 : vector<1x128xf32>
    %cst_44 = arith.constant 1.000000e+00 : f32
    %207 = vector.broadcast %cst_44 : f32 to vector<1x128xf32>
    %208 = arith.addf %207, %206 : vector<1x128xf32>
    %209 = arith.divf %207, %208 : vector<1x128xf32>
    %210 = vector.extract_strided_slice %201 {offsets = [0, 128], sizes = [1, 128], strides = [1, 1]} : vector<1x384xf32> to vector<1x128xf32>
    %211 = vector.extract_strided_slice %200 {offsets = [0, 128], sizes = [1, 128], strides = [1, 1]} : vector<1x384xf32> to vector<1x128xf32>
    %212 = arith.addf %210, %211 : vector<1x128xf32>
    %213 = arith.negf %212 : vector<1x128xf32>
    %214 = math.exp %213 : vector<1x128xf32>
    %cst_45 = arith.constant 1.000000e+00 : f32
    %215 = vector.broadcast %cst_45 : f32 to vector<1x128xf32>
    %216 = arith.addf %215, %214 : vector<1x128xf32>
    %217 = arith.divf %215, %216 : vector<1x128xf32>
    %218 = vector.extract_strided_slice %201 {offsets = [0, 256], sizes = [1, 128], strides = [1, 1]} : vector<1x384xf32> to vector<1x128xf32>
    %219 = vector.extract_strided_slice %200 {offsets = [0, 256], sizes = [1, 128], strides = [1, 1]} : vector<1x384xf32> to vector<1x128xf32>
    %220 = arith.addf %219, %11 : vector<1x128xf32>
    %221 = arith.mulf %209, %220 : vector<1x128xf32>
    %222 = arith.addf %218, %221 : vector<1x128xf32>
    %223 = math.tanh %222 : vector<1x128xf32>
    %cst_46 = arith.constant 1.000000e+00 : f32
    %224 = vector.broadcast %cst_46 : f32 to vector<1x128xf32>
    %225 = arith.subf %224, %217 : vector<1x128xf32>
    %226 = arith.mulf %225, %223 : vector<1x128xf32>
    %227 = arith.mulf %217, %197 : vector<1x128xf32>
    %228 = arith.addf %226, %227 : vector<1x128xf32>
    %c6 = arith.constant 6 : index
    %c0_47 = arith.constant 0 : index
    %229 = vector.load %arg7[%c6, %c0_47] : memref<8x128xf32, #tpu.memory_space<vmem>>, vector<1x128xf32>
    tpu.vector_store %arg7[%c6, %c0_47], %228 {strides = array<i32>} : memref<8x128xf32, #tpu.memory_space<vmem>>, vector<1x128xf32>,
    %230 = arith.truncf %228 : vector<1x128xf32> to vector<1x128xbf16>
    %cst_48 = arith.constant dense<0.000000e+00> : vector<1x384xf32>
    %231 = tpu.matmul %230, %10, %cst_48 {dimension_numbers = #tpu.dot_dimension_numbers<[1], [0], [0], [1], [0, 0, 1, 1], [], []>} : vector<1x128xbf16>, vector<128x384xbf16>, vector<1x384xf32> -> vector<1x384xf32>
    %232 = vector.extract_strided_slice %9 {offsets = [7, 0], sizes = [1, 384], strides = [1, 1]} : vector<8x384xf32> to vector<1x384xf32>
    %233 = vector.extract_strided_slice %232 {offsets = [0, 0], sizes = [1, 128], strides = [1, 1]} : vector<1x384xf32> to vector<1x128xf32>
    %234 = vector.extract_strided_slice %231 {offsets = [0, 0], sizes = [1, 128], strides = [1, 1]} : vector<1x384xf32> to vector<1x128xf32>
    %235 = arith.addf %233, %234 : vector<1x128xf32>
    %236 = arith.negf %235 : vector<1x128xf32>
    %237 = math.exp %236 : vector<1x128xf32>
    %cst_49 = arith.constant 1.000000e+00 : f32
    %238 = vector.broadcast %cst_49 : f32 to vector<1x128xf32>
    %239 = arith.addf %238, %237 : vector<1x128xf32>
    %240 = arith.divf %238, %239 : vector<1x128xf32>
    %241 = vector.extract_strided_slice %232 {offsets = [0, 128], sizes = [1, 128], strides = [1, 1]} : vector<1x384xf32> to vector<1x128xf32>
    %242 = vector.extract_strided_slice %231 {offsets = [0, 128], sizes = [1, 128], strides = [1, 1]} : vector<1x384xf32> to vector<1x128xf32>
    %243 = arith.addf %241, %242 : vector<1x128xf32>
    %244 = arith.negf %243 : vector<1x128xf32>
    %245 = math.exp %244 : vector<1x128xf32>
    %cst_50 = arith.constant 1.000000e+00 : f32
    %246 = vector.broadcast %cst_50 : f32 to vector<1x128xf32>
    %247 = arith.addf %246, %245 : vector<1x128xf32>
    %248 = arith.divf %246, %247 : vector<1x128xf32>
    %249 = vector.extract_strided_slice %232 {offsets = [0, 256], sizes = [1, 128], strides = [1, 1]} : vector<1x384xf32> to vector<1x128xf32>
    %250 = vector.extract_strided_slice %231 {offsets = [0, 256], sizes = [1, 128], strides = [1, 1]} : vector<1x384xf32> to vector<1x128xf32>
    %251 = arith.addf %250, %11 : vector<1x128xf32>
    %252 = arith.mulf %240, %251 : vector<1x128xf32>
    %253 = arith.addf %249, %252 : vector<1x128xf32>
    %254 = math.tanh %253 : vector<1x128xf32>
    %cst_51 = arith.constant 1.000000e+00 : f32
    %255 = vector.broadcast %cst_51 : f32 to vector<1x128xf32>
    %256 = arith.subf %255, %248 : vector<1x128xf32>
    %257 = arith.mulf %256, %254 : vector<1x128xf32>
    %258 = arith.mulf %248, %228 : vector<1x128xf32>
    %259 = arith.addf %257, %258 : vector<1x128xf32>
    %c7 = arith.constant 7 : index
    %c0_52 = arith.constant 0 : index
    %260 = vector.load %arg7[%c7, %c0_52] : memref<8x128xf32, #tpu.memory_space<vmem>>, vector<1x128xf32>
    tpu.vector_store %arg7[%c7, %c0_52], %259 {strides = array<i32>} : memref<8x128xf32, #tpu.memory_space<vmem>>, vector<1x128xf32>,
    %c0_53 = arith.constant 0 : index
    %c0_54 = arith.constant 0 : index
    %261 = vector.load %arg8[%c0_53, %c0_54] : memref<1x128xf32, #tpu.memory_space<vmem>>, vector<1x128xf32>
    tpu.vector_store %arg8[%c0_53, %c0_54], %259 {strides = array<i32>} : memref<1x128xf32, #tpu.memory_space<vmem>>, vector<1x128xf32>,
    return
  }
  func.func @transform_0(%arg0: i32) -> (i32, i32) {
    %c0_i32 = arith.constant 0 : i32
    %c0_i32_0 = arith.constant 0 : i32
    return %arg0, %c0_i32 : i32, i32
  }
  func.func @transform_1(%arg0: i32) -> (i32, i32) {
    %c0_i32 = arith.constant 0 : i32
    %c0_i32_0 = arith.constant 0 : i32
    %c0_i32_1 = arith.constant 0 : i32
    return %c0_i32, %c0_i32_0 : i32, i32
  }
  func.func @transform_2(%arg0: i32) -> (i32, i32) {
    %c0_i32 = arith.constant 0 : i32
    %c0_i32_0 = arith.constant 0 : i32
    %c0_i32_1 = arith.constant 0 : i32
    return %c0_i32, %c0_i32_0 : i32, i32
  }
  func.func @transform_3(%arg0: i32) -> (i32, i32) {
    %c0_i32 = arith.constant 0 : i32
    %c0_i32_0 = arith.constant 0 : i32
    %c0_i32_1 = arith.constant 0 : i32
    return %c0_i32, %c0_i32_0 : i32, i32
  }
  func.func @transform_4(%arg0: i32) -> (i32, i32) {
    %c0_i32 = arith.constant 0 : i32
    %c0_i32_0 = arith.constant 0 : i32
    %c0_i32_1 = arith.constant 0 : i32
    return %c0_i32, %c0_i32_0 : i32, i32
  }
  func.func @transform_5(%arg0: i32) -> (i32, i32) {
    %c0_i32 = arith.constant 0 : i32
    %c0_i32_0 = arith.constant 0 : i32
    %c0_i32_1 = arith.constant 0 : i32
    return %c0_i32, %c0_i32_0 : i32, i32
  }
  func.func @transform_6(%arg0: i32) -> (i32, i32) {
    %c0_i32 = arith.constant 0 : i32
    %c0_i32_0 = arith.constant 0 : i32
    return %arg0, %c0_i32 : i32, i32
  }
}

</mosaic_0001>

<llo_original>
// kernel: _gru_encode.1
$region0: #{_gru_encode.1}
  #allocation0 [shape = 'u32[]', space=smem, size = 0x4, offset = 0x4, fixed_abs, tag = 'smem constant byte address 0x4 - core index']
  #allocation1 [shape = 'u32[144,128]{1,0:T(1,128)}', space=vmem, size = 0x12000, scoped, tag = 'internal scratch']
  #allocation2 [shape = 'f32[1,128]{1,0:T(1,128)}', space=vmem, size = 0x200, scoped, tag = 'scratch operand']
  %s0 = inlined_call_operand.vmem [shape: f32[8,128], index: 0, kind: input, shape index: {}]
  %s1 = inlined_call_operand.vmem [shape: f32[1,128], index: 1, kind: input, shape index: {}]
  %s2 = inlined_call_operand.hbm [shape: bf16[128,384], index: 2, kind: input, shape index: {}]
  %s3 = inlined_call_operand.hbm [shape: bf16[128,384], index: 3, kind: input, shape index: {}]
  %s4 = inlined_call_operand.vmem [shape: f32[1,384], index: 4, kind: input, shape index: {}]
  %s5 = inlined_call_operand.vmem [shape: f32[1,128], index: 5, kind: input, shape index: {}]
  %s6 = inlined_call_operand.vmem [shape: f32[8,128], index: 6, kind: output, shape index: {}]
  %s7 = sld [smem:[#allocation0]]
  $region46: #{_gru_encode.1} parent=0
    _
  %s9 = ssub.s32 1, %s7
  %s10 = scalar_select 0, %s9, %s7
  $region1: #{_gru_encode.1} parent=0
    #allocation3 [shape = 'u8[98304]{0}', space=vmem, size = 0x18000, scoped, tag = 'input window, operand 2, single buffered']
    #allocation4 [shape = 's32[1]{0}', space=sflag, size = 0x4, scoped, tag = 'scoped memory for _gru_encode.1']
    #allocation5 [shape = 'u8[98304]{0}', space=vmem, size = 0x18000, scoped, tag = 'input window, operand 3, single buffered']
    #allocation6 [shape = 's32[1]{0}', space=sflag, size = 0x4, scoped, tag = 'scoped memory for _gru_encode.1']
    %11 = vsyncpa [#allocation4], 0
    %12 = vsyncpa [#allocation6], 0
    // Predicated region
    $region2: #{_gru_encode.1} parent=1 // pred_check
      _
    $region3: #{_gru_encode.1} parent=1 // pred_check_branch
      %14 = sbr.rel (0) target = $region5
    $region4: #{_gru_encode.1} parent=1 // pred_region
      _
    $region5: #{_gru_encode.1} parent=1 // pred_fallthru
      _
    // Predicated region
    $region6: #{_gru_encode.1} parent=1 // pred_check
      _
    $region7: #{_gru_encode.1} parent=1 // pred_check_branch
      %16 = sbr.rel (0) target = $region9
    $region8: #{_gru_encode.1} parent=1 // pred_region
      _
    $region9: #{_gru_encode.1} parent=1 // pred_fallthru
      _
    // Predicated region
    $region10: #{_gru_encode.1} parent=1 // pred_check
      _
    $region11: #{_gru_encode.1} parent=1 // pred_check_branch
      %18 = sbr.rel (0) target = $region13
    $region12: #{_gru_encode.1} parent=1 // pred_region
      %s20 = ssub.s32 3072, 3072
      %21 = vsyncadd [#allocation4], %s20
      %s22 = sshll.u32 [#allocation3], 4
      %s23 = int_to_ptr.vmem [resolvable:$true] %s22
      %28 = dma.hbm_to_vmem [thread:$0]  %s2, 3072, %s23, [#allocation4], 192, 192, 12
    $region13: #{_gru_encode.1} parent=1 // pred_fallthru
      _
    // Predicated region
    $region14: #{_gru_encode.1} parent=1 // pred_check
      _
    $region15: #{_gru_encode.1} parent=1 // pred_check_branch
      %30 = sbr.rel (0) target = $region17
    $region16: #{_gru_encode.1} parent=1 // pred_region
      %s32 = ssub.s32 3072, 3072
      %33 = vsyncadd [#allocation6], %s32
      %s34 = sshll.u32 [#allocation5], 4
      %s35 = int_to_ptr.vmem [resolvable:$true] %s34
      %40 = dma.hbm_to_vmem [thread:$0]  %s3, 3072, %s35, [#allocation6], 192, 192, 12
    $region17: #{_gru_encode.1} parent=1 // pred_fallthru
      _
    // Predicated region
    $region18: #{_gru_encode.1} parent=1 // pred_check
      _
    $region19: #{_gru_encode.1} parent=1 // pred_check_branch
      %42 = sbr.rel (0) target = $region21
    $region20: #{_gru_encode.1} parent=1 // pred_region
      _
    $region21: #{_gru_encode.1} parent=1 // pred_fallthru
      _
    // Predicated region
    $region22: #{_gru_encode.1} parent=1 // pred_check
      _
    $region23: #{_gru_encode.1} parent=1 // pred_check_branch
      %44 = sbr.rel (0) target = $region25
    $region24: #{_gru_encode.1} parent=1 // pred_region
      _
    $region25: #{_gru_encode.1} parent=1 // pred_fallthru
      _
    // Predicated region
    $region26: #{_gru_encode.1} parent=1 // pred_check
      _
    $region27: #{_gru_encode.1} parent=1 // pred_check_branch
      %46 = sbr.rel (0) target = $region29
    $region28: #{_gru_encode.1} parent=1 // pred_region
      %47 = dma.done [#allocation4], 3072
    $region29: #{_gru_encode.1} parent=1 // pred_fallthru
      _
    // Predicated region
    $region30: #{_gru_encode.1} parent=1 // pred_check
      _
    $region31: #{_gru_encode.1} parent=1 // pred_check_branch
      %49 = sbr.rel (0) target = $region33
    $region32: #{_gru_encode.1} parent=1 // pred_region
      %50 = dma.done [#allocation6], 3072
    $region33: #{_gru_encode.1} parent=1 // pred_fallthru
      _
    %p52 = scmp.eq.s32.totalorder 0, 0
    // Predicated region
    $region34: #{_gru_encode.1} parent=1 // pred_check
      %p53 = pneg %p52
    $region35: #{_gru_encode.1} parent=1 // pred_check_branch
      %55 = sbr.rel (%p53) target = $region37
    $region36: #{_gru_encode.1} parent=1 // pred_region
      %v56 = vld [vmem:[%s1] sm:$0x1]
      %57 = vst [vmem:[#allocation2] sm:$0x1] %v56
    $region37: #{_gru_encode.1} parent=1 // pred_fallthru
      _
    %v58 = vld [vmem:[%s0] sm:$0xff]
    %v59 = vpack.c.bf16 %v58, %v58
    %v60 = vld [vmem:[#allocation3] sm:$0xff]
    %v61 = vld [vmem:[#allocation3 + $0x8] sm:$0xf]
    %v62 = vld [vmem:[#allocation3 + $0xc] sm:$0xff]
    %v63 = vld [vmem:[#allocation3 + $0x14] sm:$0xf]
    %v64 = vld [vmem:[#allocation3 + $0x18] sm:$0xff]
    %v65 = vld [vmem:[#allocation3 + $0x20] sm:$0xf]
    %v66 = vld [vmem:[#allocation3 + $0x24] sm:$0xff]
    %v67 = vld [vmem:[#allocation3 + $0x2c] sm:$0xf]
    %v68 = vld [vmem:[#allocation3 + $0x30] sm:$0xff]
    %v69 = vld [vmem:[#allocation3 + $0x38] sm:$0xf]
    %v70 = vld [vmem:[#allocation3 + $0x3c] sm:$0xff]
    %v71 = vld [vmem:[#allocation3 + $0x44] sm:$0xf]
    %v72 = vld [vmem:[#allocation3 + $0x48] sm:$0xff]
    %v73 = vld [vmem:[#allocation3 + $0x50] sm:$0xf]
    %v74 = vld [vmem:[#allocation3 + $0x54] sm:$0xff]
    %v75 = vld [vmem:[#allocation3 + $0x5c] sm:$0xf]
    %v76 = vld [vmem:[#allocation3 + $0x60] sm:$0xff]
    %v77 = vld [vmem:[#allocation3 + $0x68] sm:$0xf]
    %v78 = vld [vmem:[#allocation3 + $0x6c] sm:$0xff]
    %v79 = vld [vmem:[#allocation3 + $0x74] sm:$0xf]
    %v80 = vld [vmem:[#allocation3 + $0x78] sm:$0xff]
    %v81 = vld [vmem:[#allocation3 + $0x80] sm:$0xf]
    %v82 = vld [vmem:[#allocation3 + $0x84] sm:$0xff]
    %v83 = vld [vmem:[#allocation3 + $0x8c] sm:$0xf]
    %v84 = vld [vmem:[#allocation3 + $0x90] sm:$0xff]
    %v85 = vld [vmem:[#allocation3 + $0x98] sm:$0xf]
    %v86 = vld [vmem:[#allocation3 + $0x9c] sm:$0xff]
    %v87 = vld [vmem:[#allocation3 + $0xa4] sm:$0xf]
    %v88 = vld [vmem:[#allocation3 + $0xa8] sm:$0xff]
    %v89 = vld [vmem:[#allocation3 + $0xb0] sm:$0xf]
    %v90 = vld [vmem:[#allocation3 + $0xb4] sm:$0xff]
    %v91 = vld [vmem:[#allocation3 + $0xbc] sm:$0xf]
    %v92 = vld [vmem:[%s4] sm:$0x7]
    %v94 = vlaneseq
    %v95 = vshrl.u32 %v94, 7
    %v96 = vsub.s32 0, %v95
    %v97 = vrot.slane %v92, %v96
    %v98 = vlaneseq
    %v99 = vshrl.u32 %v98, 7
    %v100 = vsub.s32 1, %v99
    %v101 = vrot.slane %v92, %v100
    %v102 = vlaneseq
    %v103 = vshrl.u32 %v102, 7
    %v104 = vsub.s32 2, %v103
    %v105 = vrot.slane %v92, %v104
    %v141 = vunpack.c.l.b16 %v60
    %v142 = vunpack.c.h.b16 %v60
    %v143 = vunpack.c.l.b16 %v61
    %v144 = vunpack.c.l.b16 %v62
    %v145 = vunpack.c.h.b16 %v62
    %v146 = vunpack.c.l.b16 %v63
    %v147 = vunpack.c.l.b16 %v64
    %v148 = vunpack.c.h.b16 %v64
    %v149 = vunpack.c.l.b16 %v65
    %v150 = vunpack.c.l.b16 %v66
    %v151 = vunpack.c.h.b16 %v66
    %v152 = vunpack.c.l.b16 %v67
    %v153 = vunpack.c.l.b16 %v68
    %v154 = vunpack.c.h.b16 %v68
    %v155 = vunpack.c.l.b16 %v69
    %v156 = vunpack.c.l.b16 %v70
    %v157 = vunpack.c.h.b16 %v70
    %v158 = vunpack.c.l.b16 %v71
    %v159 = vunpack.c.l.b16 %v72
    %v160 = vunpack.c.h.b16 %v72
    %v161 = vunpack.c.l.b16 %v73
    %v162 = vunpack.c.l.b16 %v74
    %v163 = vunpack.c.h.b16 %v74
    %v164 = vunpack.c.l.b16 %v75
    %v165 = vunpack.c.l.b16 %v76
    %v166 = vunpack.c.h.b16 %v76
    %v167 = vunpack.c.l.b16 %v77
    %v168 = vunpack.c.l.b16 %v78
    %v169 = vunpack.c.h.b16 %v78
    %v170 = vunpack.c.l.b16 %v79
    %v171 = vunpack.c.l.b16 %v80
    %v172 = vunpack.c.h.b16 %v80
    %v173 = vunpack.c.l.b16 %v81
    %v174 = vunpack.c.l.b16 %v82
    %v175 = vunpack.c.h.b16 %v82
    %v176 = vunpack.c.l.b16 %v83
    %v177 = vunpack.c.l.b16 %v84
    %v178 = vunpack.c.h.b16 %v84
    %v179 = vunpack.c.l.b16 %v85
    %v180 = vunpack.c.l.b16 %v86
    %v181 = vunpack.c.h.b16 %v86
    %v182 = vunpack.c.l.b16 %v87
    %v183 = vunpack.c.l.b16 %v88
    %v184 = vunpack.c.h.b16 %v88
    %v185 = vunpack.c.l.b16 %v89
    %v186 = vunpack.c.l.b16 %v90
    %v187 = vunpack.c.h.b16 %v90
    %v188 = vunpack.c.l.b16 %v91
    %v189 = vpack.c.b16 %v144, %v141
    %v190 = vpack.c.b16 %v145, %v142
    %v191 = vpack.c.b16 %v146, %v143
    %v192 = vpack.c.b16 %v150, %v147
    %v193 = vpack.c.b16 %v151, %v148
    %v194 = vpack.c.b16 %v152, %v149
    %v195 = vpack.c.b16 %v156, %v153
    %v196 = vpack.c.b16 %v157, %v154
    %v197 = vpack.c.b16 %v158, %v155
    %v198 = vpack.c.b16 %v162, %v159
    %v199 = vpack.c.b16 %v163, %v160
    %v200 = vpack.c.b16 %v164, %v161
    %v201 = vpack.c.b16 %v168, %v165
    %v202 = vpack.c.b16 %v169, %v166
    %v203 = vpack.c.b16 %v170, %v167
    %v204 = vpack.c.b16 %v174, %v171
    %v205 = vpack.c.b16 %v175, %v172
    %v206 = vpack.c.b16 %v176, %v173
    %v207 = vpack.c.b16 %v180, %v177
    %v208 = vpack.c.b16 %v181, %v178
    %v209 = vpack.c.b16 %v182, %v179
    %v210 = vpack.c.b16 %v186, %v183
    %v211 = vpack.c.b16 %v187, %v184
    %v212 = vpack.c.b16 %v188, %v185
    %237 = vmatprep.subr.bf16.mxu0 %v190
    %238 = vmatpush1.bf16.msra.mxu0 %v189
    %239 = vmatprep.subr.bf16.mxu0 %v193
    %240 = vmatpush1.bf16.msra.mxu0 %v192
    %241 = vmatprep.subr.bf16.mxu0 %v196
    %242 = vmatpush1.bf16.msra.mxu0 %v195
    %243 = vmatprep.subr.bf16.mxu0 %v199
    %244 = vmatpush1.bf16.msra.mxu0 %v198
    %245 = vmatprep.subr.bf16.mxu0 %v202
    %246 = vmatpush1.bf16.msra.mxu0 %v201
    %247 = vmatprep.subr.bf16.mxu0 %v205
    %248 = vmatpush1.bf16.msra.mxu0 %v204
    %249 = vmatprep.subr.bf16.mxu0 %v208
    %250 = vmatpush1.bf16.msra.mxu0 %v207
    %251 = vmatprep.subr.bf16.mxu0 %v211
    %252 = vmatpush1.bf16.msra.mxu0 %v210
    %253 = vmatprep.subr.bf16.mxu0 0
    %254 = vmatpush1.bf16.msra.mxu0 0
    %255 = vmatprep.subr.bf16.mxu0 0
    %256 = vmatpush1.bf16.msra.mxu0 0
    %257 = vmatprep.subr.bf16.mxu0 0
    %258 = vmatpush1.bf16.msra.mxu0 0
    %259 = vmatprep.subr.bf16.mxu0 0
    %260 = vmatpush1.bf16.msra.mxu0 0
    %261 = vmatprep.subr.bf16.mxu0 0
    %262 = vmatpush1.bf16.msra.mxu0 0
    %263 = vmatprep.subr.bf16.mxu0 0
    %264 = vmatpush1.bf16.msra.mxu0 0
    %265 = vmatprep.subr.bf16.mxu0 0
    %266 = vmatpush1.bf16.msra.mxu0 0
    %267 = vmatprep.subr.bf16.mxu0 0
    %268 = vmatpush1.bf16.msra.mxu0 0
    %269 = vmatprep.mubr.bf16.mxu0 0
    %270 = vmatmul.mubr.bf16.gmra.mrb[0].mxu0 %v59
    %v271 = vpop.f32.mrb[0].mxu0
    %v272 = vadd.f32 %v97, %v271
    %v273 = vpop.f32.mrb[0].mxu0
    %v274 = vadd.f32 %v101, %v273
    %v275 = vpop.f32.mrb[0].mxu0
    %v276 = vpop.f32.mrb[0].mxu0
    %277 = vdwg.mxu0
    %278 = vmatprep.subr.bf16.mxu0 0
    %279 = vmatpush1.bf16.msra.mxu0 %v191
    %280 = vmatprep.subr.bf16.mxu0 0
    %281 = vmatpush1.bf16.msra.mxu0 %v194
    %282 = vmatprep.subr.bf16.mxu0 0
    %283 = vmatpush1.bf16.msra.mxu0 %v197
    %284 = vmatprep.subr.bf16.mxu0 0
    %285 = vmatpush1.bf16.msra.mxu0 %v200
    %286 = vmatprep.subr.bf16.mxu0 0
    %287 = vmatpush1.bf16.msra.mxu0 %v203
    %288 = vmatprep.subr.bf16.mxu0 0
    %289 = vmatpush1.bf16.msra.mxu0 %v206
    %290 = vmatprep.subr.bf16.mxu0 0
    %291 = vmatpush1.bf16.msra.mxu0 %v209
    %292 = vmatprep.subr.bf16.mxu0 0
    %293 = vmatpush1.bf16.msra.mxu0 %v212
    %294 = vmatprep.subr.bf16.mxu0 0
    %295 = vmatpush1.bf16.msra.mxu0 0
    %296 = vmatprep.subr.bf16.mxu0 0
    %297 = vmatpush1.bf16.msra.mxu0 0
    %298 = vmatprep.subr.bf16.mxu0 0
    %299 = vmatpush1.bf16.msra.mxu0 0
    %300 = vmatprep.subr.bf16.mxu0 0
    %301 = vmatpush1.bf16.msra.mxu0 0
    %302 = vmatprep.subr.bf16.mxu0 0
    %303 = vmatpush1.bf16.msra.mxu0 0
    %304 = vmatprep.subr.bf16.mxu0 0
    %305 = vmatpush1.bf16.msra.mxu0 0
    %306 = vmatprep.subr.bf16.mxu0 0
    %307 = vmatpush1.bf16.msra.mxu0 0
    %308 = vmatprep.subr.bf16.mxu0 0
    %309 = vmatpush1.bf16.msra.mxu0 0
    %310 = vmatprep.mubr.bf16.mxu0 0
    %311 = vmatmul.mubr.bf16.gmra.mrb[0].mxu0 %v59
    %v312 = vpop.f32.mrb[0].mxu0
    %v313 = vadd.f32 %v105, %v312
    %v314 = vpop.f32.mrb[0].mxu0
    %v315 = vpop.f32.mrb[0].mxu0
    %v316 = vpop.f32.mrb[0].mxu0
    %317 = vdwg.mxu0
    %v318 = vld [vmem:[#allocation5] sm:$0xff]
    %v319 = vld [vmem:[#allocation5 + $0x8] sm:$0xf]
    %v320 = vld [vmem:[#allocation5 + $0xc] sm:$0xff]
    %v321 = vld [vmem:[#allocation5 + $0x14] sm:$0xf]
    %v322 = vld [vmem:[#allocation5 + $0x18] sm:$0xff]
    %v323 = vld [vmem:[#allocation5 + $0x20] sm:$0xf]
    %v324 = vld [vmem:[#allocation5 + $0x24] sm:$0xff]
    %v325 = vld [vmem:[#allocation5 + $0x2c] sm:$0xf]
    %v326 = vld [vmem:[#allocation5 + $0x30] sm:$0xff]
    %v327 = vld [vmem:[#allocation5 + $0x38] sm:$0xf]
    %v328 = vld [vmem:[#allocation5 + $0x3c] sm:$0xff]
    %v329 = vld [vmem:[#allocation5 + $0x44] sm:$0xf]
    %v330 = vld [vmem:[#allocation5 + $0x48] sm:$0xff]
    %v331 = vld [vmem:[#allocation5 + $0x50] sm:$0xf]
    %v332 = vld [vmem:[#allocation5 + $0x54] sm:$0xff]
    %v333 = vld [vmem:[#allocation5 + $0x5c] sm:$0xf]
    %v334 = vld [vmem:[#allocation5 + $0x60] sm:$0xff]
    %v335 = vld [vmem:[#allocation5 + $0x68] sm:$0xf]
    %v336 = vld [vmem:[#allocation5 + $0x6c] sm:$0xff]
    %v337 = vld [vmem:[#allocation5 + $0x74] sm:$0xf]
    %v338 = vld [vmem:[#allocation5 + $0x78] sm:$0xff]
    %v339 = vld [vmem:[#allocation5 + $0x80] sm:$0xf]
    %v340 = vld [vmem:[#allocation5 + $0x84] sm:$0xff]
    %v341 = vld [vmem:[#allocation5 + $0x8c] sm:$0xf]
    %v342 = vld [vmem:[#allocation5 + $0x90] sm:$0xff]
    %v343 = vld [vmem:[#allocation5 + $0x98] sm:$0xf]
    %v344 = vld [vmem:[#allocation5 + $0x9c] sm:$0xff]
    %v345 = vld [vmem:[#allocation5 + $0xa4] sm:$0xf]
    %v346 = vld [vmem:[#allocation5 + $0xa8] sm:$0xff]
    %v347 = vld [vmem:[#allocation5 + $0xb0] sm:$0xf]
    %v348 = vld [vmem:[#allocation5 + $0xb4] sm:$0xff]
    %v349 = vld [vmem:[#allocation5 + $0xbc] sm:$0xf]
    %v350 = vld [vmem:[%s5] sm:$0x1]
    %v351 = vld [vmem:[#allocation2] sm:$0x1]
    %v352 = vpack.c.bf16 %v351, %v351
    %v385 = vunpack.c.l.b16 %v318
    %v386 = vunpack.c.h.b16 %v318
    %v387 = vunpack.c.l.b16 %v319
    %v388 = vunpack.c.l.b16 %v320
    %v389 = vunpack.c.h.b16 %v320
    %v390 = vunpack.c.l.b16 %v321
    %v391 = vunpack.c.l.b16 %v322
    %v392 = vunpack.c.h.b16 %v322
    %v393 = vunpack.c.l.b16 %v323
    %v394 = vunpack.c.l.b16 %v324
    %v395 = vunpack.c.h.b16 %v324
    %v396 = vunpack.c.l.b16 %v325
    %v397 = vunpack.c.l.b16 %v326
    %v398 = vunpack.c.h.b16 %v326
    %v399 = vunpack.c.l.b16 %v327
    %v400 = vunpack.c.l.b16 %v328
    %v401 = vunpack.c.h.b16 %v328
    %v402 = vunpack.c.l.b16 %v329
    %v403 = vunpack.c.l.b16 %v330
    %v404 = vunpack.c.h.b16 %v330
    %v405 = vunpack.c.l.b16 %v331
    %v406 = vunpack.c.l.b16 %v332
    %v407 = vunpack.c.h.b16 %v332
    %v408 = vunpack.c.l.b16 %v333
    %v409 = vunpack.c.l.b16 %v334
    %v410 = vunpack.c.h.b16 %v334
    %v411 = vunpack.c.l.b16 %v335
    %v412 = vunpack.c.l.b16 %v336
    %v413 = vunpack.c.h.b16 %v336
    %v414 = vunpack.c.l.b16 %v337
    %v415 = vunpack.c.l.b16 %v338
    %v416 = vunpack.c.h.b16 %v338
    %v417 = vunpack.c.l.b16 %v339
    %v418 = vunpack.c.l.b16 %v340
    %v419 = vunpack.c.h.b16 %v340
    %v420 = vunpack.c.l.b16 %v341
    %v421 = vunpack.c.l.b16 %v342
    %v422 = vunpack.c.h.b16 %v342
    %v423 = vunpack.c.l.b16 %v343
    %v424 = vunpack.c.l.b16 %v344
    %v425 = vunpack.c.h.b16 %v344
    %v426 = vunpack.c.l.b16 %v345
    %v427 = vunpack.c.l.b16 %v346
    %v428 = vunpack.c.h.b16 %v346
    %v429 = vunpack.c.l.b16 %v347
    %v430 = vunpack.c.l.b16 %v348
    %v431 = vunpack.c.h.b16 %v348
    %v432 = vunpack.c.l.b16 %v349
    %v433 = vpack.c.b16 %v388, %v385
    %v434 = vpack.c.b16 %v389, %v386
    %v435 = vpack.c.b16 %v390, %v387
    %v436 = vpack.c.b16 %v394, %v391
    %v437 = vpack.c.b16 %v395, %v392
    %v438 = vpack.c.b16 %v396, %v393
    %v439 = vpack.c.b16 %v400, %v397
    %v440 = vpack.c.b16 %v401, %v398
    %v441 = vpack.c.b16 %v402, %v399
    %v442 = vpack.c.b16 %v406, %v403
    %v443 = vpack.c.b16 %v407, %v404
    %v444 = vpack.c.b16 %v408, %v405
    %v445 = vpack.c.b16 %v412, %v409
    %v446 = vpack.c.b16 %v413, %v410
    %v447 = vpack.c.b16 %v414, %v411
    %v448 = vpack.c.b16 %v418, %v415
    %v449 = vpack.c.b16 %v419, %v416
    %v450 = vpack.c.b16 %v420, %v417
    %v451 = vpack.c.b16 %v424, %v421
    %v452 = vpack.c.b16 %v425, %v422
    %v453 = vpack.c.b16 %v426, %v423
    %v454 = vpack.c.b16 %v430, %v427
    %v455 = vpack.c.b16 %v431, %v428
    %v456 = vpack.c.b16 %v432, %v429
    %481 = vmatprep.subr.bf16.mxu0 %v434
    %482 = vmatpush1.bf16.msra.mxu0 %v433
    %483 = vmatprep.subr.bf16.mxu0 %v437
    %484 = vmatpush1.bf16.msra.mxu0 %v436
    %485 = vmatprep.subr.bf16.mxu0 %v440
    %486 = vmatpush1.bf16.msra.mxu0 %v439
    %487 = vmatprep.subr.bf16.mxu0 %v443
    %488 = vmatpush1.bf16.msra.mxu0 %v442
    %489 = vmatprep.subr.bf16.mxu0 %v446
    %490 = vmatpush1.bf16.msra.mxu0 %v445
    %491 = vmatprep.subr.bf16.mxu0 %v449
    %492 = vmatpush1.bf16.msra.mxu0 %v448
    %493 = vmatprep.subr.bf16.mxu0 %v452
    %494 = vmatpush1.bf16.msra.mxu0 %v451
    %495 = vmatprep.subr.bf16.mxu0 %v455
    %496 = vmatpush1.bf16.msra.mxu0 %v454
    %497 = vmatprep.subr.bf16.mxu0 0
    %498 = vmatpush1.bf16.msra.mxu0 0
    %499 = vmatprep.subr.bf16.mxu0 0
    %500 = vmatpush1.bf16.msra.mxu0 0
    %501 = vmatprep.subr.bf16.mxu0 0
    %502 = vmatpush1.bf16.msra.mxu0 0
    %503 = vmatprep.subr.bf16.mxu0 0
    %504 = vmatpush1.bf16.msra.mxu0 0
    %505 = vmatprep.subr.bf16.mxu0 0
    %506 = vmatpush1.bf16.msra.mxu0 0
    %507 = vmatprep.subr.bf16.mxu0 0
    %508 = vmatpush1.bf16.msra.mxu0 0
    %509 = vmatprep.subr.bf16.mxu0 0
    %510 = vmatpush1.bf16.msra.mxu0 0
    %511 = vmatprep.subr.bf16.mxu0 0
    %512 = vmatpush1.bf16.msra.mxu0 0
    %513 = vmatprep.mubr.bf16.mxu0 0
    %514 = vmatmul.mubr.bf16.gmra.mrb[0].mxu0 %v352
    %v515 = vpop.f32.mrb[0].mxu0
    %v516 = vadd.f32 0.0, %v515
    %v517 = vpop.f32.mrb[0].mxu0
    %v518 = vadd.f32 0.0, %v517
    %v519 = vpop.f32.mrb[0].mxu0
    %v520 = vpop.f32.mrb[0].mxu0
    %521 = vdwg.mxu0
    %522 = vmatprep.subr.bf16.mxu0 0
    %523 = vmatpush1.bf16.msra.mxu0 %v435
    %524 = vmatprep.subr.bf16.mxu0 0
    %525 = vmatpush1.bf16.msra.mxu0 %v438
    %526 = vmatprep.subr.bf16.mxu0 0
    %527 = vmatpush1.bf16.msra.mxu0 %v441
    %528 = vmatprep.subr.bf16.mxu0 0
    %529 = vmatpush1.bf16.msra.mxu0 %v444
    %530 = vmatprep.subr.bf16.mxu0 0
    %531 = vmatpush1.bf16.msra.mxu0 %v447
    %532 = vmatprep.subr.bf16.mxu0 0
    %533 = vmatpush1.bf16.msra.mxu0 %v450
    %534 = vmatprep.subr.bf16.mxu0 0
    %535 = vmatpush1.bf16.msra.mxu0 %v453
    %536 = vmatprep.subr.bf16.mxu0 0
    %537 = vmatpush1.bf16.msra.mxu0 %v456
    %538 = vmatprep.subr.bf16.mxu0 0
    %539 = vmatpush1.bf16.msra.mxu0 0
    %540 = vmatprep.subr.bf16.mxu0 0
    %541 = vmatpush1.bf16.msra.mxu0 0
    %542 = vmatprep.subr.bf16.mxu0 0
    %543 = vmatpush1.bf16.msra.mxu0 0
    %544 = vmatprep.subr.bf16.mxu0 0
    %545 = vmatpush1.bf16.msra.mxu0 0
    %546 = vmatprep.subr.bf16.mxu0 0
    %547 = vmatpush1.bf16.msra.mxu0 0
    %548 = vmatprep.subr.bf16.mxu0 0
    %549 = vmatpush1.bf16.msra.mxu0 0
    %550 = vmatprep.subr.bf16.mxu0 0
    %551 = vmatpush1.bf16.msra.mxu0 0
    %552 = vmatprep.subr.bf16.mxu0 0
    %553 = vmatpush1.bf16.msra.mxu0 0
    %554 = vmatprep.mubr.bf16.mxu0 0
    %555 = vmatmul.mubr.bf16.gmra.mrb[0].mxu0 %v352
    %v556 = vpop.f32.mrb[0].mxu0
    %v557 = vadd.f32 0.0, %v556
    %v558 = vpop.f32.mrb[0].mxu0
    %v559 = vpop.f32.mrb[0].mxu0
    %v560 = vpop.f32.mrb[0].mxu0
    %561 = vdwg.mxu0
    %v562 = vadd.f32 %v272, %v516
    %v563 = vxor.u32 %v562, 2147483648
    %v564 = vmul.f32 %v563, 1.442695
    %v565 = vpow.pop %v564
    %v566 = vadd.f32 %v565, 1.0
    %v567 = vrcp.pop %v566
    %v568 = vmul.f32 1.0, %v567
    %v569 = vadd.f32 %v274, %v518
    %v570 = vxor.u32 %v569, 2147483648
    %v571 = vmul.f32 %v570, 1.442695
    %v572 = vpow.pop %v571
    %v573 = vadd.f32 %v572, 1.0
    %v574 = vrcp.pop %v573
    %v575 = vmul.f32 1.0, %v574
    %v576 = vadd.f32 %v557, %v350
    %v577 = vmul.f32 %v568, %v576
    %v578 = vadd.f32 %v313, %v577
    %v579 = vtanh.pop %v578
    %v580 = vsub.f32 1.0, %v575
    %v581 = vmul.f32 %v580, %v579
    %v582 = vmul.f32 %v575, %v351
    %v583 = vadd.f32 %v581, %v582
    %584 = vst [vmem:[%s6] sm:$0x1] %v583
    %v585 = vpack.c.bf16 %v583, %v583
    %586 = vmatprep.subr.bf16.mxu0 %v434
    %587 = vmatpush1.bf16.msra.mxu0 %v433
    %588 = vmatprep.subr.bf16.mxu0 %v437
    %589 = vmatpush1.bf16.msra.mxu0 %v436
    %590 = vmatprep.subr.bf16.mxu0 %v440
    %591 = vmatpush1.bf16.msra.mxu0 %v439
    %592 = vmatprep.subr.bf16.mxu0 %v443
    %593 = vmatpush1.bf16.msra.mxu0 %v442
    %594 = vmatprep.subr.bf16.mxu0 %v446
    %595 = vmatpush1.bf16.msra.mxu0 %v445
    %596 = vmatprep.subr.bf16.mxu0 %v449
    %597 = vmatpush1.bf16.msra.mxu0 %v448
    %598 = vmatprep.subr.bf16.mxu0 %v452
    %599 = vmatpush1.bf16.msra.mxu0 %v451
    %600 = vmatprep.subr.bf16.mxu0 %v455
    %601 = vmatpush1.bf16.msra.mxu0 %v454
    %602 = vmatprep.subr.bf16.mxu0 0
    %603 = vmatpush1.bf16.msra.mxu0 0
    %604 = vmatprep.subr.bf16.mxu0 0
    %605 = vmatpush1.bf16.msra.mxu0 0
    %606 = vmatprep.subr.bf16.mxu0 0
    %607 = vmatpush1.bf16.msra.mxu0 0
    %608 = vmatprep.subr.bf16.mxu0 0
    %609 = vmatpush1.bf16.msra.mxu0 0
    %610 = vmatprep.subr.bf16.mxu0 0
    %611 = vmatpush1.bf16.msra.mxu0 0
    %612 = vmatprep.subr.bf16.mxu0 0
    %613 = vmatpush1.bf16.msra.mxu0 0
    %614 = vmatprep.subr.bf16.mxu0 0
    %615 = vmatpush1.bf16.msra.mxu0 0
    %616 = vmatprep.subr.bf16.mxu0 0
    %617 = vmatpush1.bf16.msra.mxu0 0
    %618 = vmatprep.mubr.bf16.mxu0 0
    %619 = vmatmul.mubr.bf16.gmra.mrb[0].mxu0 %v585
    %v620 = vpop.f32.mrb[0].mxu0
    %v621 = vadd.f32 0.0, %v620
    %v622 = vpop.f32.mrb[0].mxu0
    %v623 = vadd.f32 0.0, %v622
    %v624 = vpop.f32.mrb[0].mxu0
    %v625 = vpop.f32.mrb[0].mxu0
    %626 = vdwg.mxu0
    %627 = vmatprep.subr.bf16.mxu0 0
    %628 = vmatpush1.bf16.msra.mxu0 %v435
    %629 = vmatprep.subr.bf16.mxu0 0
    %630 = vmatpush1.bf16.msra.mxu0 %v438
    %631 = vmatprep.subr.bf16.mxu0 0
    %632 = vmatpush1.bf16.msra.mxu0 %v441
    %633 = vmatprep.subr.bf16.mxu0 0
    %634 = vmatpush1.bf16.msra.mxu0 %v444
    %635 = vmatprep.subr.bf16.mxu0 0
    %636 = vmatpush1.bf16.msra.mxu0 %v447
    %637 = vmatprep.subr.bf16.mxu0 0
    %638 = vmatpush1.bf16.msra.mxu0 %v450
    %639 = vmatprep.subr.bf16.mxu0 0
    %640 = vmatpush1.bf16.msra.mxu0 %v453
    %641 = vmatprep.subr.bf16.mxu0 0
    %642 = vmatpush1.bf16.msra.mxu0 %v456
    %643 = vmatprep.subr.bf16.mxu0 0
    %644 = vmatpush1.bf16.msra.mxu0 0
    %645 = vmatprep.subr.bf16.mxu0 0
    %646 = vmatpush1.bf16.msra.mxu0 0
    %647 = vmatprep.subr.bf16.mxu0 0
    %648 = vmatpush1.bf16.msra.mxu0 0
    %649 = vmatprep.subr.bf16.mxu0 0
    %650 = vmatpush1.bf16.msra.mxu0 0
    %651 = vmatprep.subr.bf16.mxu0 0
    %652 = vmatpush1.bf16.msra.mxu0 0
    %653 = vmatprep.subr.bf16.mxu0 0
    %654 = vmatpush1.bf16.msra.mxu0 0
    %655 = vmatprep.subr.bf16.mxu0 0
    %656 = vmatpush1.bf16.msra.mxu0 0
    %657 = vmatprep.subr.bf16.mxu0 0
    %658 = vmatpush1.bf16.msra.mxu0 0
    %659 = vmatprep.mubr.bf16.mxu0 0
    %660 = vmatmul.mubr.bf16.gmra.mrb[0].mxu0 %v585
    %v661 = vpop.f32.mrb[0].mxu0
    %v662 = vadd.f32 0.0, %v661
    %v663 = vpop.f32.mrb[0].mxu0
    %v664 = vpop.f32.mrb[0].mxu0
    %v665 = vpop.f32.mrb[0].mxu0
    %666 = vdwg.mxu0
    %v668 = vrot.slane %v621, 7
    %v670 = vadd.f32 %v272, %v668
    %v671 = vxor.u32 %v670, 2147483648
    %v672 = vmul.f32 %v671, 1.442695
    %v673 = vpow.pop %v672
    %v674 = vadd.f32 %v673, 1.0
    %v675 = vrcp.pop %v674
    %v676 = vmul.f32 1.0, %v675
    %v678 = vrot.slane %v623, 7
    %v680 = vadd.f32 %v274, %v678
    %v681 = vxor.u32 %v680, 2147483648
    %v682 = vmul.f32 %v681, 1.442695
    %v683 = vpow.pop %v682
    %v684 = vadd.f32 %v683, 1.0
    %v685 = vrcp.pop %v684
    %v686 = vmul.f32 1.0, %v685
    %v687 = vadd.f32 %v662, %v350
    %v689 = vrot.slane %v687, 7
    %v691 = vmul.f32 %v676, %v689
    %v692 = vadd.f32 %v313, %v691
    %v693 = vtanh.pop %v692
    %v694 = vsub.f32 1.0, %v686
    %v695 = vmul.f32 %v694, %v693
    %v697 = vrot.slane %v583, 7
    %v699 = vmul.f32 %v686, %v697
    %v700 = vadd.f32 %v695, %v699
    %701 = vst [vmem:[%s6] sm:$0x2] %v700
    %v702 = vpack.c.bf16 %v700, %v700
    %v704 = vshrl.u32 %v702, 16
    %707 = vmatprep.subr.bf16.mxu0 %v434
    %708 = vmatpush1.bf16.msra.mxu0 %v433
    %709 = vmatprep.subr.bf16.mxu0 %v437
    %710 = vmatpush1.bf16.msra.mxu0 %v436
    %711 = vmatprep.subr.bf16.mxu0 %v440
    %712 = vmatpush1.bf16.msra.mxu0 %v439
    %713 = vmatprep.subr.bf16.mxu0 %v443
    %714 = vmatpush1.bf16.msra.mxu0 %v442
    %715 = vmatprep.subr.bf16.mxu0 %v446
    %716 = vmatpush1.bf16.msra.mxu0 %v445
    %717 = vmatprep.subr.bf16.mxu0 %v449
    %718 = vmatpush1.bf16.msra.mxu0 %v448
    %719 = vmatprep.subr.bf16.mxu0 %v452
    %720 = vmatpush1.bf16.msra.mxu0 %v451
    %721 = vmatprep.subr.bf16.mxu0 %v455
    %722 = vmatpush1.bf16.msra.mxu0 %v454
    %723 = vmatprep.subr.bf16.mxu0 0
    %724 = vmatpush1.bf16.msra.mxu0 0
    %725 = vmatprep.subr.bf16.mxu0 0
    %726 = vmatpush1.bf16.msra.mxu0 0
    %727 = vmatprep.subr.bf16.mxu0 0
    %728 = vmatpush1.bf16.msra.mxu0 0
    %729 = vmatprep.subr.bf16.mxu0 0
    %730 = vmatpush1.bf16.msra.mxu0 0
    %731 = vmatprep.subr.bf16.mxu0 0
    %732 = vmatpush1.bf16.msra.mxu0 0
    %733 = vmatprep.subr.bf16.mxu0 0
    %734 = vmatpush1.bf16.msra.mxu0 0
    %735 = vmatprep.subr.bf16.mxu0 0
    %736 = vmatpush1.bf16.msra.mxu0 0
    %737 = vmatprep.subr.bf16.mxu0 0
    %738 = vmatpush1.bf16.msra.mxu0 0
    %739 = vmatprep.mubr.bf16.mxu0 0
    %740 = vmatmul.mubr.bf16.gmra.mrb[0].mxu0 %v704
    %v741 = vpop.f32.mrb[0].mxu0
    %v742 = vadd.f32 0.0, %v741
    %v743 = vpop.f32.mrb[0].mxu0
    %v744 = vadd.f32 0.0, %v743
    %v745 = vpop.f32.mrb[0].mxu0
    %v746 = vpop.f32.mrb[0].mxu0
    %747 = vdwg.mxu0
    %748 = vmatprep.subr.bf16.mxu0 0
    %749 = vmatpush1.bf16.msra.mxu0 %v435
    %750 = vmatprep.subr.bf16.mxu0 0
    %751 = vmatpush1.bf16.msra.mxu0 %v438
    %752 = vmatprep.subr.bf16.mxu0 0
    %753 = vmatpush1.bf16.msra.mxu0 %v441
    %754 = vmatprep.subr.bf16.mxu0 0
    %755 = vmatpush1.bf16.msra.mxu0 %v444
    %756 = vmatprep.subr.bf16.mxu0 0
    %757 = vmatpush1.bf16.msra.mxu0 %v447
    %758 = vmatprep.subr.bf16.mxu0 0
    %759 = vmatpush1.bf16.msra.mxu0 %v450
    %760 = vmatprep.subr.bf16.mxu0 0
    %761 = vmatpush1.bf16.msra.mxu0 %v453
    %762 = vmatprep.subr.bf16.mxu0 0
    %763 = vmatpush1.bf16.msra.mxu0 %v456
    %764 = vmatprep.subr.bf16.mxu0 0
    %765 = vmatpush1.bf16.msra.mxu0 0
    %766 = vmatprep.subr.bf16.mxu0 0
    %767 = vmatpush1.bf16.msra.mxu0 0
    %768 = vmatprep.subr.bf16.mxu0 0
    %769 = vmatpush1.bf16.msra.mxu0 0
    %770 = vmatprep.subr.bf16.mxu0 0
    %771 = vmatpush1.bf16.msra.mxu0 0
    %772 = vmatprep.subr.bf16.mxu0 0
    %773 = vmatpush1.bf16.msra.mxu0 0
    %774 = vmatprep.subr.bf16.mxu0 0
    %775 = vmatpush1.bf16.msra.mxu0 0
    %776 = vmatprep.subr.bf16.mxu0 0
    %777 = vmatpush1.bf16.msra.mxu0 0
    %778 = vmatprep.subr.bf16.mxu0 0
    %779 = vmatpush1.bf16.msra.mxu0 0
    %780 = vmatprep.mubr.bf16.mxu0 0
    %781 = vmatmul.mubr.bf16.gmra.mrb[0].mxu0 %v704
    %v782 = vpop.f32.mrb[0].mxu0
    %v783 = vadd.f32 0.0, %v782
    %v784 = vpop.f32.mrb[0].mxu0
    %v785 = vpop.f32.mrb[0].mxu0
    %v786 = vpop.f32.mrb[0].mxu0
    %787 = vdwg.mxu0
    %v789 = vrot.slane %v742, 6
    %v791 = vadd.f32 %v272, %v789
    %v792 = vxor.u32 %v791, 2147483648
    %v793 = vmul.f32 %v792, 1.442695
    %v794 = vpow.pop %v793
    %v795 = vadd.f32 %v794, 1.0
    %v796 = vrcp.pop %v795
    %v797 = vmul.f32 1.0, %v796
    %v799 = vrot.slane %v744, 6
    %v801 = vadd.f32 %v274, %v799
    %v802 = vxor.u32 %v801, 2147483648
    %v803 = vmul.f32 %v802, 1.442695
    %v804 = vpow.pop %v803
    %v805 = vadd.f32 %v804, 1.0
    %v806 = vrcp.pop %v805
    %v807 = vmul.f32 1.0, %v806
    %v808 = vadd.f32 %v783, %v350
    %v810 = vrot.slane %v808, 6
    %v812 = vmul.f32 %v797, %v810
    %v813 = vadd.f32 %v313, %v812
    %v814 = vtanh.pop %v813
    %v815 = vsub.f32 1.0, %v807
    %v816 = vmul.f32 %v815, %v814
    %v818 = vrot.slane %v700, 7
    %v820 = vmul.f32 %v807, %v818
    %v821 = vadd.f32 %v816, %v820
    %822 = vst [vmem:[%s6] sm:$0x4] %v821
    %v823 = vpack.c.bf16 %v821, %v821
    %v825 = vrot.slane %v823, 1
    %827 = vmatprep.subr.bf16.mxu0 %v434
    %828 = vmatpush1.bf16.msra.mxu0 %v433
    %829 = vmatprep.subr.bf16.mxu0 %v437
    %830 = vmatpush1.bf16.msra.mxu0 %v436
    %831 = vmatprep.subr.bf16.mxu0 %v440
    %832 = vmatpush1.bf16.msra.mxu0 %v439
    %833 = vmatprep.subr.bf16.mxu0 %v443
    %834 = vmatpush1.bf16.msra.mxu0 %v442
    %835 = vmatprep.subr.bf16.mxu0 %v446
    %836 = vmatpush1.bf16.msra.mxu0 %v445
    %837 = vmatprep.subr.bf16.mxu0 %v449
    %838 = vmatpush1.bf16.msra.mxu0 %v448
    %839 = vmatprep.subr.bf16.mxu0 %v452
    %840 = vmatpush1.bf16.msra.mxu0 %v451
    %841 = vmatprep.subr.bf16.mxu0 %v455
    %842 = vmatpush1.bf16.msra.mxu0 %v454
    %843 = vmatprep.subr.bf16.mxu0 0
    %844 = vmatpush1.bf16.msra.mxu0 0
    %845 = vmatprep.subr.bf16.mxu0 0
    %846 = vmatpush1.bf16.msra.mxu0 0
    %847 = vmatprep.subr.bf16.mxu0 0
    %848 = vmatpush1.bf16.msra.mxu0 0
    %849 = vmatprep.subr.bf16.mxu0 0
    %850 = vmatpush1.bf16.msra.mxu0 0
    %851 = vmatprep.subr.bf16.mxu0 0
    %852 = vmatpush1.bf16.msra.mxu0 0
    %853 = vmatprep.subr.bf16.mxu0 0
    %854 = vmatpush1.bf16.msra.mxu0 0
    %855 = vmatprep.subr.bf16.mxu0 0
    %856 = vmatpush1.bf16.msra.mxu0 0
    %857 = vmatprep.subr.bf16.mxu0 0
    %858 = vmatpush1.bf16.msra.mxu0 0
    %859 = vmatprep.mubr.bf16.mxu0 0
    %860 = vmatmul.mubr.bf16.gmra.mrb[0].mxu0 %v825
    %v861 = vpop.f32.mrb[0].mxu0
    %v862 = vadd.f32 0.0, %v861
    %v863 = vpop.f32.mrb[0].mxu0
    %v864 = vadd.f32 0.0, %v863
    %v865 = vpop.f32.mrb[0].mxu0
    %v866 = vpop.f32.mrb[0].mxu0
    %867 = vdwg.mxu0
    %868 = vmatprep.subr.bf16.mxu0 0
    %869 = vmatpush1.bf16.msra.mxu0 %v435
    %870 = vmatprep.subr.bf16.mxu0 0
    %871 = vmatpush1.bf16.msra.mxu0 %v438
    %872 = vmatprep.subr.bf16.mxu0 0
    %873 = vmatpush1.bf16.msra.mxu0 %v441
    %874 = vmatprep.subr.bf16.mxu0 0
    %875 = vmatpush1.bf16.msra.mxu0 %v444
    %876 = vmatprep.subr.bf16.mxu0 0
    %877 = vmatpush1.bf16.msra.mxu0 %v447
    %878 = vmatprep.subr.bf16.mxu0 0
    %879 = vmatpush1.bf16.msra.mxu0 %v450
    %880 = vmatprep.subr.bf16.mxu0 0
    %881 = vmatpush1.bf16.msra.mxu0 %v453
    %882 = vmatprep.subr.bf16.mxu0 0
    %883 = vmatpush1.bf16.msra.mxu0 %v456
    %884 = vmatprep.subr.bf16.mxu0 0
    %885 = vmatpush1.bf16.msra.mxu0 0
    %886 = vmatprep.subr.bf16.mxu0 0
    %887 = vmatpush1.bf16.msra.mxu0 0
    %888 = vmatprep.subr.bf16.mxu0 0
    %889 = vmatpush1.bf16.msra.mxu0 0
    %890 = vmatprep.subr.bf16.mxu0 0
    %891 = vmatpush1.bf16.msra.mxu0 0
    %892 = vmatprep.subr.bf16.mxu0 0
    %893 = vmatpush1.bf16.msra.mxu0 0
    %894 = vmatprep.subr.bf16.mxu0 0
    %895 = vmatpush1.bf16.msra.mxu0 0
    %896 = vmatprep.subr.bf16.mxu0 0
    %897 = vmatpush1.bf16.msra.mxu0 0
    %898 = vmatprep.subr.bf16.mxu0 0
    %899 = vmatpush1.bf16.msra.mxu0 0
    %900 = vmatprep.mubr.bf16.mxu0 0
    %901 = vmatmul.mubr.bf16.gmra.mrb[0].mxu0 %v825
    %v902 = vpop.f32.mrb[0].mxu0
    %v903 = vadd.f32 0.0, %v902
    %v904 = vpop.f32.mrb[0].mxu0
    %v905 = vpop.f32.mrb[0].mxu0
    %v906 = vpop.f32.mrb[0].mxu0
    %907 = vdwg.mxu0
    %v909 = vrot.slane %v862, 5
    %v911 = vadd.f32 %v272, %v909
    %v912 = vxor.u32 %v911, 2147483648
    %v913 = vmul.f32 %v912, 1.442695
    %v914 = vpow.pop %v913
    %v915 = vadd.f32 %v914, 1.0
    %v916 = vrcp.pop %v915
    %v917 = vmul.f32 1.0, %v916
    %v919 = vrot.slane %v864, 5
    %v921 = vadd.f32 %v274, %v919
    %v922 = vxor.u32 %v921, 2147483648
    %v923 = vmul.f32 %v922, 1.442695
    %v924 = vpow.pop %v923
    %v925 = vadd.f32 %v924, 1.0
    %v926 = vrcp.pop %v925
    %v927 = vmul.f32 1.0, %v926
    %v928 = vadd.f32 %v903, %v350
    %v930 = vrot.slane %v928, 5
    %v932 = vmul.f32 %v917, %v930
    %v933 = vadd.f32 %v313, %v932
    %v934 = vtanh.pop %v933
    %v935 = vsub.f32 1.0, %v927
    %v936 = vmul.f32 %v935, %v934
    %v938 = vrot.slane %v821, 7
    %v940 = vmul.f32 %v927, %v938
    %v941 = vadd.f32 %v936, %v940
    %942 = vst [vmem:[%s6] sm:$0x8] %v941
    %v943 = vpack.c.bf16 %v941, %v941
    %v945 = vshrl.u32 %v943, 16
    %v947 = vrot.slane %v945, 1
    %949 = vmatprep.subr.bf16.mxu0 %v434
    %950 = vmatpush1.bf16.msra.mxu0 %v433
    %951 = vmatprep.subr.bf16.mxu0 %v437
    %952 = vmatpush1.bf16.msra.mxu0 %v436
    %953 = vmatprep.subr.bf16.mxu0 %v440
    %954 = vmatpush1.bf16.msra.mxu0 %v439
    %955 = vmatprep.subr.bf16.mxu0 %v443
    %956 = vmatpush1.bf16.msra.mxu0 %v442
    %957 = vmatprep.subr.bf16.mxu0 %v446
    %958 = vmatpush1.bf16.msra.mxu0 %v445
    %959 = vmatprep.subr.bf16.mxu0 %v449
    %960 = vmatpush1.bf16.msra.mxu0 %v448
    %961 = vmatprep.subr.bf16.mxu0 %v452
    %962 = vmatpush1.bf16.msra.mxu0 %v451
    %963 = vmatprep.subr.bf16.mxu0 %v455
    %964 = vmatpush1.bf16.msra.mxu0 %v454
    %965 = vmatprep.subr.bf16.mxu0 0
    %966 = vmatpush1.bf16.msra.mxu0 0
    %967 = vmatprep.subr.bf16.mxu0 0
    %968 = vmatpush1.bf16.msra.mxu0 0
    %969 = vmatprep.subr.bf16.mxu0 0
    %970 = vmatpush1.bf16.msra.mxu0 0
    %971 = vmatprep.subr.bf16.mxu0 0
    %972 = vmatpush1.bf16.msra.mxu0 0
    %973 = vmatprep.subr.bf16.mxu0 0
    %974 = vmatpush1.bf16.msra.mxu0 0
    %975 = vmatprep.subr.bf16.mxu0 0
    %976 = vmatpush1.bf16.msra.mxu0 0
    %977 = vmatprep.subr.bf16.mxu0 0
    %978 = vmatpush1.bf16.msra.mxu0 0
    %979 = vmatprep.subr.bf16.mxu0 0
    %980 = vmatpush1.bf16.msra.mxu0 0
    %981 = vmatprep.mubr.bf16.mxu0 0
    %982 = vmatmul.mubr.bf16.gmra.mrb[0].mxu0 %v947
    %v983 = vpop.f32.mrb[0].mxu0
    %v984 = vadd.f32 0.0, %v983
    %v985 = vpop.f32.mrb[0].mxu0
    %v986 = vadd.f32 0.0, %v985
    %v987 = vpop.f32.mrb[0].mxu0
    %v988 = vpop.f32.mrb[0].mxu0
    %989 = vdwg.mxu0
    %990 = vmatprep.subr.bf16.mxu0 0
    %991 = vmatpush1.bf16.msra.mxu0 %v435
    %992 = vmatprep.subr.bf16.mxu0 0
    %993 = vmatpush1.bf16.msra.mxu0 %v438
    %994 = vmatprep.subr.bf16.mxu0 0
    %995 = vmatpush1.bf16.msra.mxu0 %v441
    %996 = vmatprep.subr.bf16.mxu0 0
    %997 = vmatpush1.bf16.msra.mxu0 %v444
    %998 = vmatprep.subr.bf16.mxu0 0
    %999 = vmatpush1.bf16.msra.mxu0 %v447
    %1000 = vmatprep.subr.bf16.mxu0 0
    %1001 = vmatpush1.bf16.msra.mxu0 %v450
    %1002 = vmatprep.subr.bf16.mxu0 0
    %1003 = vmatpush1.bf16.msra.mxu0 %v453
    %1004 = vmatprep.subr.bf16.mxu0 0
    %1005 = vmatpush1.bf16.msra.mxu0 %v456
    %1006 = vmatprep.subr.bf16.mxu0 0
    %1007 = vmatpush1.bf16.msra.mxu0 0
    %1008 = vmatprep.subr.bf16.mxu0 0
    %1009 = vmatpush1.bf16.msra.mxu0 0
    %1010 = vmatprep.subr.bf16.mxu0 0
    %1011 = vmatpush1.bf16.msra.mxu0 0
    %1012 = vmatprep.subr.bf16.mxu0 0
    %1013 = vmatpush1.bf16.msra.mxu0 0
    %1014 = vmatprep.subr.bf16.mxu0 0
    %1015 = vmatpush1.bf16.msra.mxu0 0
    %1016 = vmatprep.subr.bf16.mxu0 0
    %1017 = vmatpush1.bf16.msra.mxu0 0
    %1018 = vmatprep.subr.bf16.mxu0 0
    %1019 = vmatpush1.bf16.msra.mxu0 0
    %1020 = vmatprep.subr.bf16.mxu0 0
    %1021 = vmatpush1.bf16.msra.mxu0 0
    %1022 = vmatprep.mubr.bf16.mxu0 0
    %1023 = vmatmul.mubr.bf16.gmra.mrb[0].mxu0 %v947
    %v1024 = vpop.f32.mrb[0].mxu0
    %v1025 = vadd.f32 0.0, %v1024
    %v1026 = vpop.f32.mrb[0].mxu0
    %v1027 = vpop.f32.mrb[0].mxu0
    %v1028 = vpop.f32.mrb[0].mxu0
    %1029 = vdwg.mxu0
    %v1031 = vrot.slane %v984, 4
    %v1033 = vadd.f32 %v272, %v1031
    %v1034 = vxor.u32 %v1033, 2147483648
    %v1035 = vmul.f32 %v1034, 1.442695
    %v1036 = vpow.pop %v1035
    %v1037 = vadd.f32 %v1036, 1.0
    %v1038 = vrcp.pop %v1037
    %v1039 = vmul.f32 1.0, %v1038
    %v1041 = vrot.slane %v986, 4
    %v1043 = vadd.f32 %v274, %v1041
    %v1044 = vxor.u32 %v1043, 2147483648
    %v1045 = vmul.f32 %v1044, 1.442695
    %v1046 = vpow.pop %v1045
    %v1047 = vadd.f32 %v1046, 1.0
    %v1048 = vrcp.pop %v1047
    %v1049 = vmul.f32 1.0, %v1048
    %v1050 = vadd.f32 %v1025, %v350
    %v1052 = vrot.slane %v1050, 4
    %v1054 = vmul.f32 %v1039, %v1052
    %v1055 = vadd.f32 %v313, %v1054
    %v1056 = vtanh.pop %v1055
    %v1057 = vsub.f32 1.0, %v1049
    %v1058 = vmul.f32 %v1057, %v1056
    %v1060 = vrot.slane %v941, 7
    %v1062 = vmul.f32 %v1049, %v1060
    %v1063 = vadd.f32 %v1058, %v1062
    %1064 = vst [vmem:[%s6] sm:$0x10] %v1063
    %v1065 = vpack.c.bf16 %v1063, %v1063
    %v1067 = vrot.slane %v1065, 2
    %1069 = vmatprep.subr.bf16.mxu0 %v434
    %1070 = vmatpush1.bf16.msra.mxu0 %v433
    %1071 = vmatprep.subr.bf16.mxu0 %v437
    %1072 = vmatpush1.bf16.msra.mxu0 %v436
    %1073 = vmatprep.subr.bf16.mxu0 %v440
    %1074 = vmatpush1.bf16.msra.mxu0 %v439
    %1075 = vmatprep.subr.bf16.mxu0 %v443
    %1076 = vmatpush1.bf16.msra.mxu0 %v442
    %1077 = vmatprep.subr.bf16.mxu0 %v446
    %1078 = vmatpush1.bf16.msra.mxu0 %v445
    %1079 = vmatprep.subr.bf16.mxu0 %v449
    %1080 = vmatpush1.bf16.msra.mxu0 %v448
    %1081 = vmatprep.subr.bf16.mxu0 %v452
    %1082 = vmatpush1.bf16.msra.mxu0 %v451
    %1083 = vmatprep.subr.bf16.mxu0 %v455
    %1084 = vmatpush1.bf16.msra.mxu0 %v454
    %1085 = vmatprep.subr.bf16.mxu0 0
    %1086 = vmatpush1.bf16.msra.mxu0 0
    %1087 = vmatprep.subr.bf16.mxu0 0
    %1088 = vmatpush1.bf16.msra.mxu0 0
    %1089 = vmatprep.subr.bf16.mxu0 0
    %1090 = vmatpush1.bf16.msra.mxu0 0
    %1091 = vmatprep.subr.bf16.mxu0 0
    %1092 = vmatpush1.bf16.msra.mxu0 0
    %1093 = vmatprep.subr.bf16.mxu0 0
    %1094 = vmatpush1.bf16.msra.mxu0 0
    %1095 = vmatprep.subr.bf16.mxu0 0
    %1096 = vmatpush1.bf16.msra.mxu0 0
    %1097 = vmatprep.subr.bf16.mxu0 0
    %1098 = vmatpush1.bf16.msra.mxu0 0
    %1099 = vmatprep.subr.bf16.mxu0 0
    %1100 = vmatpush1.bf16.msra.mxu0 0
    %1101 = vmatprep.mubr.bf16.mxu0 0
    %1102 = vmatmul.mubr.bf16.gmra.mrb[0].mxu0 %v1067
    %v1103 = vpop.f32.mrb[0].mxu0
    %v1104 = vadd.f32 0.0, %v1103
    %v1105 = vpop.f32.mrb[0].mxu0
    %v1106 = vadd.f32 0.0, %v1105
    %v1107 = vpop.f32.mrb[0].mxu0
    %v1108 = vpop.f32.mrb[0].mxu0
    %1109 = vdwg.mxu0
    %1110 = vmatprep.subr.bf16.mxu0 0
    %1111 = vmatpush1.bf16.msra.mxu0 %v435
    %1112 = vmatprep.subr.bf16.mxu0 0
    %1113 = vmatpush1.bf16.msra.mxu0 %v438
    %1114 = vmatprep.subr.bf16.mxu0 0
    %1115 = vmatpush1.bf16.msra.mxu0 %v441
    %1116 = vmatprep.subr.bf16.mxu0 0
    %1117 = vmatpush1.bf16.msra.mxu0 %v444
    %1118 = vmatprep.subr.bf16.mxu0 0
    %1119 = vmatpush1.bf16.msra.mxu0 %v447
    %1120 = vmatprep.subr.bf16.mxu0 0
    %1121 = vmatpush1.bf16.msra.mxu0 %v450
    %1122 = vmatprep.subr.bf16.mxu0 0
    %1123 = vmatpush1.bf16.msra.mxu0 %v453
    %1124 = vmatprep.subr.bf16.mxu0 0
    %1125 = vmatpush1.bf16.msra.mxu0 %v456
    %1126 = vmatprep.subr.bf16.mxu0 0
    %1127 = vmatpush1.bf16.msra.mxu0 0
    %1128 = vmatprep.subr.bf16.mxu0 0
    %1129 = vmatpush1.bf16.msra.mxu0 0
    %1130 = vmatprep.subr.bf16.mxu0 0
    %1131 = vmatpush1.bf16.msra.mxu0 0
    %1132 = vmatprep.subr.bf16.mxu0 0
    %1133 = vmatpush1.bf16.msra.mxu0 0
    %1134 = vmatprep.subr.bf16.mxu0 0
    %1135 = vmatpush1.bf16.msra.mxu0 0
    %1136 = vmatprep.subr.bf16.mxu0 0
    %1137 = vmatpush1.bf16.msra.mxu0 0
    %1138 = vmatprep.subr.bf16.mxu0 0
    %1139 = vmatpush1.bf16.msra.mxu0 0
    %1140 = vmatprep.subr.bf16.mxu0 0
    %1141 = vmatpush1.bf16.msra.mxu0 0
    %1142 = vmatprep.mubr.bf16.mxu0 0
    %1143 = vmatmul.mubr.bf16.gmra.mrb[0].mxu0 %v1067
    %v1144 = vpop.f32.mrb[0].mxu0
    %v1145 = vadd.f32 0.0, %v1144
    %v1146 = vpop.f32.mrb[0].mxu0
    %v1147 = vpop.f32.mrb[0].mxu0
    %v1148 = vpop.f32.mrb[0].mxu0
    %1149 = vdwg.mxu0
    %v1151 = vrot.slane %v1104, 3
    %v1153 = vadd.f32 %v272, %v1151
    %v1154 = vxor.u32 %v1153, 2147483648
    %v1155 = vmul.f32 %v1154, 1.442695
    %v1156 = vpow.pop %v1155
    %v1157 = vadd.f32 %v1156, 1.0
    %v1158 = vrcp.pop %v1157
    %v1159 = vmul.f32 1.0, %v1158
    %v1161 = vrot.slane %v1106, 3
    %v1163 = vadd.f32 %v274, %v1161
    %v1164 = vxor.u32 %v1163, 2147483648
    %v1165 = vmul.f32 %v1164, 1.442695
    %v1166 = vpow.pop %v1165
    %v1167 = vadd.f32 %v1166, 1.0
    %v1168 = vrcp.pop %v1167
    %v1169 = vmul.f32 1.0, %v1168
    %v1170 = vadd.f32 %v1145, %v350
    %v1172 = vrot.slane %v1170, 3
    %v1174 = vmul.f32 %v1159, %v1172
    %v1175 = vadd.f32 %v313, %v1174
    %v1176 = vtanh.pop %v1175
    %v1177 = vsub.f32 1.0, %v1169
    %v1178 = vmul.f32 %v1177, %v1176
    %v1180 = vrot.slane %v1063, 7
    %v1182 = vmul.f32 %v1169, %v1180
    %v1183 = vadd.f32 %v1178, %v1182
    %1184 = vst [vmem:[%s6] sm:$0x20] %v1183
    %v1185 = vpack.c.bf16 %v1183, %v1183
    %v1187 = vshrl.u32 %v1185, 16
    %v1189 = vrot.slane %v1187, 2
    %1191 = vmatprep.subr.bf16.mxu0 %v434
    %1192 = vmatpush1.bf16.msra.mxu0 %v433
    %1193 = vmatprep.subr.bf16.mxu0 %v437
    %1194 = vmatpush1.bf16.msra.mxu0 %v436
    %1195 = vmatprep.subr.bf16.mxu0 %v440
    %1196 = vmatpush1.bf16.msra.mxu0 %v439
    %1197 = vmatprep.subr.bf16.mxu0 %v443
    %1198 = vmatpush1.bf16.msra.mxu0 %v442
    %1199 = vmatprep.subr.bf16.mxu0 %v446
    %1200 = vmatpush1.bf16.msra.mxu0 %v445
    %1201 = vmatprep.subr.bf16.mxu0 %v449
    %1202 = vmatpush1.bf16.msra.mxu0 %v448
    %1203 = vmatprep.subr.bf16.mxu0 %v452
    %1204 = vmatpush1.bf16.msra.mxu0 %v451
    %1205 = vmatprep.subr.bf16.mxu0 %v455
    %1206 = vmatpush1.bf16.msra.mxu0 %v454
    %1207 = vmatprep.subr.bf16.mxu0 0
    %1208 = vmatpush1.bf16.msra.mxu0 0
    %1209 = vmatprep.subr.bf16.mxu0 0
    %1210 = vmatpush1.bf16.msra.mxu0 0
    %1211 = vmatprep.subr.bf16.mxu0 0
    %1212 = vmatpush1.bf16.msra.mxu0 0
    %1213 = vmatprep.subr.bf16.mxu0 0
    %1214 = vmatpush1.bf16.msra.mxu0 0
    %1215 = vmatprep.subr.bf16.mxu0 0
    %1216 = vmatpush1.bf16.msra.mxu0 0
    %1217 = vmatprep.subr.bf16.mxu0 0
    %1218 = vmatpush1.bf16.msra.mxu0 0
    %1219 = vmatprep.subr.bf16.mxu0 0
    %1220 = vmatpush1.bf16.msra.mxu0 0
    %1221 = vmatprep.subr.bf16.mxu0 0
    %1222 = vmatpush1.bf16.msra.mxu0 0
    %1223 = vmatprep.mubr.bf16.mxu0 0
    %1224 = vmatmul.mubr.bf16.gmra.mrb[0].mxu0 %v1189
    %v1225 = vpop.f32.mrb[0].mxu0
    %v1226 = vadd.f32 0.0, %v1225
    %v1227 = vpop.f32.mrb[0].mxu0
    %v1228 = vadd.f32 0.0, %v1227
    %v1229 = vpop.f32.mrb[0].mxu0
    %v1230 = vpop.f32.mrb[0].mxu0
    %1231 = vdwg.mxu0
    %1232 = vmatprep.subr.bf16.mxu0 0
    %1233 = vmatpush1.bf16.msra.mxu0 %v435
    %1234 = vmatprep.subr.bf16.mxu0 0
    %1235 = vmatpush1.bf16.msra.mxu0 %v438
    %1236 = vmatprep.subr.bf16.mxu0 0
    %1237 = vmatpush1.bf16.msra.mxu0 %v441
    %1238 = vmatprep.subr.bf16.mxu0 0
    %1239 = vmatpush1.bf16.msra.mxu0 %v444
    %1240 = vmatprep.subr.bf16.mxu0 0
    %1241 = vmatpush1.bf16.msra.mxu0 %v447
    %1242 = vmatprep.subr.bf16.mxu0 0
    %1243 = vmatpush1.bf16.msra.mxu0 %v450
    %1244 = vmatprep.subr.bf16.mxu0 0
    %1245 = vmatpush1.bf16.msra.mxu0 %v453
    %1246 = vmatprep.subr.bf16.mxu0 0
    %1247 = vmatpush1.bf16.msra.mxu0 %v456
    %1248 = vmatprep.subr.bf16.mxu0 0
    %1249 = vmatpush1.bf16.msra.mxu0 0
    %1250 = vmatprep.subr.bf16.mxu0 0
    %1251 = vmatpush1.bf16.msra.mxu0 0
    %1252 = vmatprep.subr.bf16.mxu0 0
    %1253 = vmatpush1.bf16.msra.mxu0 0
    %1254 = vmatprep.subr.bf16.mxu0 0
    %1255 = vmatpush1.bf16.msra.mxu0 0
    %1256 = vmatprep.subr.bf16.mxu0 0
    %1257 = vmatpush1.bf16.msra.mxu0 0
    %1258 = vmatprep.subr.bf16.mxu0 0
    %1259 = vmatpush1.bf16.msra.mxu0 0
    %1260 = vmatprep.subr.bf16.mxu0 0
    %1261 = vmatpush1.bf16.msra.mxu0 0
    %1262 = vmatprep.subr.bf16.mxu0 0
    %1263 = vmatpush1.bf16.msra.mxu0 0
    %1264 = vmatprep.mubr.bf16.mxu0 0
    %1265 = vmatmul.mubr.bf16.gmra.mrb[0].mxu0 %v1189
    %v1266 = vpop.f32.mrb[0].mxu0
    %v1267 = vadd.f32 0.0, %v1266
    %v1268 = vpop.f32.mrb[0].mxu0
    %v1269 = vpop.f32.mrb[0].mxu0
    %v1270 = vpop.f32.mrb[0].mxu0
    %1271 = vdwg.mxu0
    %v1273 = vrot.slane %v1226, 2
    %v1275 = vadd.f32 %v272, %v1273
    %v1276 = vxor.u32 %v1275, 2147483648
    %v1277 = vmul.f32 %v1276, 1.442695
    %v1278 = vpow.pop %v1277
    %v1279 = vadd.f32 %v1278, 1.0
    %v1280 = vrcp.pop %v1279
    %v1281 = vmul.f32 1.0, %v1280
    %v1283 = vrot.slane %v1228, 2
    %v1285 = vadd.f32 %v274, %v1283
    %v1286 = vxor.u32 %v1285, 2147483648
    %v1287 = vmul.f32 %v1286, 1.442695
    %v1288 = vpow.pop %v1287
    %v1289 = vadd.f32 %v1288, 1.0
    %v1290 = vrcp.pop %v1289
    %v1291 = vmul.f32 1.0, %v1290
    %v1292 = vadd.f32 %v1267, %v350
    %v1294 = vrot.slane %v1292, 2
    %v1296 = vmul.f32 %v1281, %v1294
    %v1297 = vadd.f32 %v313, %v1296
    %v1298 = vtanh.pop %v1297
    %v1299 = vsub.f32 1.0, %v1291
    %v1300 = vmul.f32 %v1299, %v1298
    %v1302 = vrot.slane %v1183, 7
    %v1304 = vmul.f32 %v1291, %v1302
    %v1305 = vadd.f32 %v1300, %v1304
    %1306 = vst [vmem:[%s6] sm:$0x40] %v1305
    %v1307 = vpack.c.bf16 %v1305, %v1305
    %v1309 = vrot.slane %v1307, 3
    %1311 = vmatprep.subr.bf16.mxu0 %v434
    %1312 = vmatpush1.bf16.msra.mxu0 %v433
    %1313 = vmatprep.subr.bf16.mxu0 %v437
    %1314 = vmatpush1.bf16.msra.mxu0 %v436
    %1315 = vmatprep.subr.bf16.mxu0 %v440
    %1316 = vmatpush1.bf16.msra.mxu0 %v439
    %1317 = vmatprep.subr.bf16.mxu0 %v443
    %1318 = vmatpush1.bf16.msra.mxu0 %v442
    %1319 = vmatprep.subr.bf16.mxu0 %v446
    %1320 = vmatpush1.bf16.msra.mxu0 %v445
    %1321 = vmatprep.subr.bf16.mxu0 %v449
    %1322 = vmatpush1.bf16.msra.mxu0 %v448
    %1323 = vmatprep.subr.bf16.mxu0 %v452
    %1324 = vmatpush1.bf16.msra.mxu0 %v451
    %1325 = vmatprep.subr.bf16.mxu0 %v455
    %1326 = vmatpush1.bf16.msra.mxu0 %v454
    %1327 = vmatprep.subr.bf16.mxu0 0
    %1328 = vmatpush1.bf16.msra.mxu0 0
    %1329 = vmatprep.subr.bf16.mxu0 0
    %1330 = vmatpush1.bf16.msra.mxu0 0
    %1331 = vmatprep.subr.bf16.mxu0 0
    %1332 = vmatpush1.bf16.msra.mxu0 0
    %1333 = vmatprep.subr.bf16.mxu0 0
    %1334 = vmatpush1.bf16.msra.mxu0 0
    %1335 = vmatprep.subr.bf16.mxu0 0
    %1336 = vmatpush1.bf16.msra.mxu0 0
    %1337 = vmatprep.subr.bf16.mxu0 0
    %1338 = vmatpush1.bf16.msra.mxu0 0
    %1339 = vmatprep.subr.bf16.mxu0 0
    %1340 = vmatpush1.bf16.msra.mxu0 0
    %1341 = vmatprep.subr.bf16.mxu0 0
    %1342 = vmatpush1.bf16.msra.mxu0 0
    %1343 = vmatprep.mubr.bf16.mxu0 0
    %1344 = vmatmul.mubr.bf16.gmra.mrb[0].mxu0 %v1309
    %v1345 = vpop.f32.mrb[0].mxu0
    %v1346 = vadd.f32 0.0, %v1345
    %v1347 = vpop.f32.mrb[0].mxu0
    %v1348 = vadd.f32 0.0, %v1347
    %v1349 = vpop.f32.mrb[0].mxu0
    %v1350 = vpop.f32.mrb[0].mxu0
    %1351 = vdwg.mxu0
    %1352 = vmatprep.subr.bf16.mxu0 0
    %1353 = vmatpush1.bf16.msra.mxu0 %v435
    %1354 = vmatprep.subr.bf16.mxu0 0
    %1355 = vmatpush1.bf16.msra.mxu0 %v438
    %1356 = vmatprep.subr.bf16.mxu0 0
    %1357 = vmatpush1.bf16.msra.mxu0 %v441
    %1358 = vmatprep.subr.bf16.mxu0 0
    %1359 = vmatpush1.bf16.msra.mxu0 %v444
    %1360 = vmatprep.subr.bf16.mxu0 0
    %1361 = vmatpush1.bf16.msra.mxu0 %v447
    %1362 = vmatprep.subr.bf16.mxu0 0
    %1363 = vmatpush1.bf16.msra.mxu0 %v450
    %1364 = vmatprep.subr.bf16.mxu0 0
    %1365 = vmatpush1.bf16.msra.mxu0 %v453
    %1366 = vmatprep.subr.bf16.mxu0 0
    %1367 = vmatpush1.bf16.msra.mxu0 %v456
    %1368 = vmatprep.subr.bf16.mxu0 0
    %1369 = vmatpush1.bf16.msra.mxu0 0
    %1370 = vmatprep.subr.bf16.mxu0 0
    %1371 = vmatpush1.bf16.msra.mxu0 0
    %1372 = vmatprep.subr.bf16.mxu0 0
    %1373 = vmatpush1.bf16.msra.mxu0 0
    %1374 = vmatprep.subr.bf16.mxu0 0
    %1375 = vmatpush1.bf16.msra.mxu0 0
    %1376 = vmatprep.subr.bf16.mxu0 0
    %1377 = vmatpush1.bf16.msra.mxu0 0
    %1378 = vmatprep.subr.bf16.mxu0 0
    %1379 = vmatpush1.bf16.msra.mxu0 0
    %1380 = vmatprep.subr.bf16.mxu0 0
    %1381 = vmatpush1.bf16.msra.mxu0 0
    %1382 = vmatprep.subr.bf16.mxu0 0
    %1383 = vmatpush1.bf16.msra.mxu0 0
    %1384 = vmatprep.mubr.bf16.mxu0 0
    %1385 = vmatmul.mubr.bf16.gmra.mrb[0].mxu0 %v1309
    %v1386 = vpop.f32.mrb[0].mxu0
    %v1387 = vadd.f32 0.0, %v1386
    %v1388 = vpop.f32.mrb[0].mxu0
    %v1389 = vpop.f32.mrb[0].mxu0
    %v1390 = vpop.f32.mrb[0].mxu0
    %1391 = vdwg.mxu0
    %v1393 = vrot.slane %v1346, 1
    %v1395 = vadd.f32 %v272, %v1393
    %v1396 = vxor.u32 %v1395, 2147483648
    %v1397 = vmul.f32 %v1396, 1.442695
    %v1398 = vpow.pop %v1397
    %v1399 = vadd.f32 %v1398, 1.0
    %v1400 = vrcp.pop %v1399
    %v1401 = vmul.f32 1.0, %v1400
    %v1403 = vrot.slane %v1348, 1
    %v1405 = vadd.f32 %v274, %v1403
    %v1406 = vxor.u32 %v1405, 2147483648
    %v1407 = vmul.f32 %v1406, 1.442695
    %v1408 = vpow.pop %v1407
    %v1409 = vadd.f32 %v1408, 1.0
    %v1410 = vrcp.pop %v1409
    %v1411 = vmul.f32 1.0, %v1410
    %v1412 = vadd.f32 %v1387, %v350
    %v1414 = vrot.slane %v1412, 1
    %v1416 = vmul.f32 %v1401, %v1414
    %v1417 = vadd.f32 %v313, %v1416
    %v1418 = vtanh.pop %v1417
    %v1419 = vsub.f32 1.0, %v1411
    %v1420 = vmul.f32 %v1419, %v1418
    %v1422 = vrot.slane %v1305, 7
    %v1424 = vmul.f32 %v1411, %v1422
    %v1425 = vadd.f32 %v1420, %v1424
    %1426 = vst [vmem:[%s6] sm:$0x80] %v1425
    %1427 = vst [vmem:[#allocation2 - $0x7] sm:$0x80] %v1425
    // Predicated region
    $region38: #{_gru_encode.1} parent=1 // pred_check
      _
    $region39: #{_gru_encode.1} parent=1 // pred_check_branch
      %1429 = sbr.rel (0) target = $region41
    $region40: #{_gru_encode.1} parent=1 // pred_region
      _
    $region41: #{_gru_encode.1} parent=1 // pred_fallthru
      _
    // Predicated region
    $region42: #{_gru_encode.1} parent=1 // pred_check
      _
    $region43: #{_gru_encode.1} parent=1 // pred_check_branch
      %1431 = sbr.rel (0) target = $region45
    $region44: #{_gru_encode.1} parent=1 // pred_region
      _
    $region45: #{_gru_encode.1} parent=1 // pred_fallthru
      _
    %1432 = vsyncpa [#allocation4], 1
    %1433 = vsyncpa [#allocation6], 1

</llo_original>
